<compile_context>
chip_gen: v7x
topology: tpu7x:2x2x1
jax: 0.10.0
libtpu: 0.0.40
codegen_flags: <defaults>
</compile_context>

<pallas_src>
import functools
import math

import jax
import jax.numpy as jnp
from jax import lax
from jax.experimental import pallas as pl
from jax.experimental.pallas import tpu as pltpu


def _round_up(a, b):
    return ((a + b - 1) // b) * b


def _vmem_capacity_bytes():
    """Per-core VMEM capacity; conservative (v7x) default if the query fails."""
    try:
        return int(pltpu.get_tpu_info().vmem_capacity_bytes)
    except Exception:
        return 64 * 1024 * 1024


def _token_embedding_kernel(ids_ref, tab_ref, out_ref, *,
                            l2_norm, pack, vocab_pad, dim, precision):
    """One grid step: embed `row_tile * pack` tokens.

    ids_ref : (row_tile, pack)               int32 VMEM (pack tokens per row)
    tab_ref : (pack*vocab_pad, pack*dim)     VMEM, grid-invariant block-diagonal table
    out_ref : (row_tile, pack*dim)           VMEM, lane-dense output block
    """
    ids = ids_ref[...]
    rt = ids.shape[0]
    kdim = pack * vocab_pad

    # Packed one-hot: row g gets a 1 at column p*Vp + ids[g, p] for each pack slot p.
    # Invalid (out-of-range) ids are masked out -> zero embedding row.
    col = lax.broadcasted_iota(jnp.int32, (rt, kdim), 1)
    onehot = jnp.zeros((rt, kdim), dtype=tab_ref.dtype)
    for p in range(pack):
        idp = ids[:, p:p + 1]
        valid = (idp >= 0) & (idp < vocab_pad)
        onehot += ((col == idp + p * vocab_pad) & valid).astype(tab_ref.dtype)

    # Gather = packed one-hot @ block-diagonal table on the MXU.
    # K = pack*Vp (multiple of 128), N = pack*dim -> lane-dense result, no relayout.
    out = lax.dot_general(
        onehot, tab_ref[...],
        dimension_numbers=(((1,), (0,)), ((), ())),
        precision=precision,
        preferred_element_type=jnp.float32)          # (rt, pack*dim) f32

    if l2_norm:
        ncol = out.shape[-1]
        if pack > 1:
            # Per-token sum of squares via a block-diagonal ones matrix: each lane of
            # a token receives the sum over that token's `dim` lanes (no lane reshapes).
            r = lax.broadcasted_iota(jnp.int32, (ncol, ncol), 0) // dim
            c = lax.broadcasted_iota(jnp.int32, (ncol, ncol), 1) // dim
            seg = (r == c).astype(jnp.float32)
            sumsq = lax.dot_general(
                out * out, seg,
                dimension_numbers=(((1,), (0,)), ((), ())),
                precision=jax.lax.Precision.HIGHEST,
                preferred_element_type=jnp.float32)
        else:
            sumsq = jnp.sum(out * out, axis=-1, keepdims=True)
        # F.normalize: x / max(||x||_2, eps), eps=1e-12  ==  x * rsqrt(max(sumsq, eps^2))
        out = out * lax.rsqrt(jnp.maximum(sumsq, 1e-24))

    out_ref[...] = out.astype(out_ref.dtype)


def token_embedding(x, emb_table, *, l2_norm=False, token_tile=4096):
    """Pallas equivalent of TokenEmbedding.forward.

    x         : integer array, any shape (e.g. (batch, seq))
    emb_table : (num_tokens, dim) float table (nn.Embedding.weight)
    returns   : embeddings of shape x.shape + (dim,), optionally L2-normalized.
    """
    num_tokens, dim = emb_table.shape
    lead_shape = x.shape
    n = math.prod(lead_shape) if lead_shape else 1
    itemsize = jnp.dtype(emb_table.dtype).itemsize
    vmem_cap = _vmem_capacity_bytes()

    # Lane-dense packing: `pack` tokens per output row so the last dim is 128-wide.
    if 0 < dim < 128 and 128 % dim == 0:
        pack = min(128 // dim, 16)
    else:
        pack = 1
    out_cols = pack * dim

    # Pad the vocab so K = pack*Vp is a multiple of 128 (fills MXU lanes, exact: zero rows).
    k_align = max(8, 128 // pack)
    vocab_pad = _round_up(num_tokens, k_align)
    kdim = pack * vocab_pad
    table_bytes = kdim * out_cols * itemsize          # block-diagonal, VMEM-resident

    # Gate the one-hot/MXU gather path on vocab size and resident-table bytes.
    if vocab_pad > 4096 or table_bytes > int(0.30 * vmem_cap):
        # TODO(synk): large-vocab path = scalar-prefetch DMA row-gather with the table
        # left in HBM (memory_space=pl.ANY); the one-hot matmul is only right while the
        # (tile, V) one-hot and the VMEM-resident table stay small.
        raise NotImplementedError("vocabulary too large for the VMEM-resident one-hot path")

    # Flatten and pack the token ids: pack tokens per row.
    ids = x.reshape(n).astype(jnp.int32)
    n_aligned = _round_up(n, pack)
    if n_aligned != n:
        ids = jnp.pad(ids, (0, n_aligned - n))        # tail ids irrelevant (sliced off)
    n_rows = n_aligned // pack
    ids2d = ids.reshape(n_rows, pack)

    # Block-diagonal table: pack copies of the (zero-padded) table along the diagonal.
    tab = emb_table
    if vocab_pad != num_tokens:
        tab = jnp.pad(tab, ((0, vocab_pad - num_tokens), (0, 0)))
    if pack > 1:
        tab = jnp.kron(jnp.eye(pack, dtype=emb_table.dtype), tab)   # (pack*Vp, pack*dim)

    # Tile size: as large as VMEM headroom allows (few grid steps, big dense stores).
    per_row_bytes = (2 * pack * 4                    # ids block (double-buffered)
                     + 2 * out_cols * itemsize       # out block (double-buffered)
                     + kdim * itemsize               # packed one-hot temp
                     + 2 * out_cols * 4)             # f32 matmul result / l2 temps
    avail = int(0.75 * vmem_cap) - 2 * table_bytes - (2 << 20)
    cap_rows = max(8, (avail // per_row_bytes) // 8 * 8)
    desired_rows = min(max(8, _round_up(pl.cdiv(token_tile, pack), 8)), cap_rows)

    if n_rows <= desired_rows:
        row_tile = n_rows                            # full axis -> exempt from 8-row rule
        if n >= 2048 and n_rows >= 16:
            # v7x has 2 TensorCores: keep >=2 grid steps so the parallel axis can shard.
            row_tile = _round_up(pl.cdiv(n_rows, 2), 8)
    else:
        row_tile = desired_rows                      # boundary block clipped by Pallas
    grid = (pl.cdiv(n_rows, row_tile),)

    # Explicit, per-generation VMEM budget (never request the whole physical VMEM).
    vmem_needed = (2 * table_bytes
                   + 2 * row_tile * (pack * 4 + out_cols * itemsize)
                   + row_tile * (kdim * itemsize + 2 * out_cols * 4)
                   + (2 << 20))
    vmem_limit = int(min(max(vmem_needed, 8 << 20), int(0.9 * vmem_cap)))

    # Pin matmul precision so the one-hot gather reproduces nn.Embedding exactly.
    precision = (jax.lax.Precision.HIGHEST if emb_table.dtype == jnp.float32
                 else jax.lax.Precision.DEFAULT)

    cost = pl.CostEstimate(
        flops=2 * n_rows * kdim * out_cols + (3 * n_aligned * dim if l2_norm else 0),
        transcendentals=n_aligned if l2_norm else 0,
        bytes_accessed=table_bytes + n_aligned * 4 + n_rows * out_cols * itemsize,
    )

    kernel = functools.partial(
        _token_embedding_kernel,
        l2_norm=l2_norm, pack=pack, vocab_pad=vocab_pad, dim=dim, precision=precision)

    def _call(single_buffer_table):
        table_kwargs = {"pipeline_mode": pl.Buffered(1)} if single_buffer_table else {}
        grid_spec = pltpu.PrefetchScalarGridSpec(
            num_scalar_prefetch=0,
            grid=grid,
            in_specs=[
                pl.BlockSpec((row_tile, pack), lambda i: (i, 0)),        # packed token ids
                pl.BlockSpec((kdim, out_cols), lambda i: (0, 0),         # block-diag table
                             **table_kwargs),
            ],
            out_specs=pl.BlockSpec((row_tile, out_cols), lambda i: (i, 0)),
        )
        return pl.pallas_call(
            kernel,
            out_shape=jax.ShapeDtypeStruct((n_rows, out_cols), emb_table.dtype),
            grid_spec=grid_spec,
            compiler_params=pltpu.CompilerParams(
                dimension_semantics=("parallel",),   # token axis shards across TCs on v7x
                vmem_limit_bytes=vmem_limit,
            ),
            cost_estimate=cost,
        )(ids2d, tab)

    try:
        out2d = _call(True)    # single-buffer the grid-invariant table
    except Exception:
        out2d = _call(False)   # fall back if Buffered(1) is rejected by this JAX build

    out = out2d.reshape(n_aligned, dim)              # row-major regroup -> free
    if n_aligned != n:
        out = out[:n]                                # only when n % pack != 0 (tiny tail)
    return out.reshape(*lead_shape, dim)


if __name__ == "__main__":
    # Module-consistent small config: dim=32, num_tokens=64, x of shape (batch=2, seq=8).
    dim = 32
    num_tokens = 64
    batch, seq = 2, 8

    key = jax.random.PRNGKey(0)
    k_emb, k_ids, k_ids2, k_ids3 = jax.random.split(key, 4)

    # nn.Embedding default init: weight ~ N(0, 1)
    emb_table = jax.random.normal(k_emb, (num_tokens, dim), dtype=jnp.float32)
    x = jax.random.randint(k_ids, (batch, seq), 0, num_tokens, dtype=jnp.int32)

    # Default module config: l2_norm=False.
    out = jax.block_until_ready(token_embedding(x, emb_table, l2_norm=False))
    ref = emb_table[x]
    assert out.shape == (batch, seq, dim)
    assert jnp.allclose(out, ref, atol=1e-5, rtol=1e-5)

    # l2_norm=True branch.
    out_n = jax.block_until_ready(token_embedding(x, emb_table, l2_norm=True))
    ref_n = ref / jnp.maximum(jnp.sqrt(jnp.sum(ref * ref, axis=-1, keepdims=True)), 1e-12)
    assert jnp.allclose(out_n, ref_n, atol=1e-5, rtol=1e-5)

    # Multi-step grid + clipped boundary block (2400 tokens -> 2 grid steps on v7x split).
    x2 = jax.random.randint(k_ids2, (4, 600), 0, num_tokens, dtype=jnp.int32)
    out2 = jax.block_until_ready(token_embedding(x2, emb_table))
    assert out2.shape == (4, 600, dim)
    assert jnp.allclose(out2, emb_table[x2], atol=1e-5, rtol=1e-5)

    # Token count not a multiple of the pack factor (exercises tail padding + slice).
    x3 = jax.random.randint(k_ids3, (3, 601), 0, num_tokens, dtype=jnp.int32)
    out3 = jax.block_until_ready(token_embedding(x3, emb_table, l2_norm=True))
    ref3 = emb_table[x3]
    ref3 = ref3 / jnp.maximum(jnp.sqrt(jnp.sum(ref3 * ref3, axis=-1, keepdims=True)), 1e-12)
    assert out3.shape == (3, 601, dim)
    assert jnp.allclose(out3, ref3, atol=1e-5, rtol=1e-5)

    print("KERNEL_OK")
</pallas_src>

<mosaic_0001>
module attributes {stable_mosaic.version = 11 : i64} {
  func.func @_token_embedding_kernel(%arg0: i32, %arg1: memref<4x4xi32, #tpu.memory_space<vmem>>, %arg2: memref<256x128xf32, #tpu.memory_space<vmem>>, %arg3: memref<4x128xf32, #tpu.memory_space<vmem>>) attributes {dimension_semantics = [#tpu.dimension_semantics<parallel>], iteration_bounds = array<i64: 1>, scalar_prefetch = 0 : i64, scratch_operands = 0 : i64, tpu.core_type = #tpu.core_type<tc>, window_params = [{transform_indices = @transform_0, window_bounds = array<i64: 4, 4>}, {pipeline_mode = #tpu.pipeline_mode<synchronous>, transform_indices = @transform_1, window_bounds = array<i64: 256, 128>}, {transform_indices = @transform_2, window_bounds = array<i64: 4, 128>}]} {
    %c0 = arith.constant 0 : index
    %c0_0 = arith.constant 0 : index
    %0 = vector.load %arg1[%c0, %c0_0] : memref<4x4xi32, #tpu.memory_space<vmem>>, vector<4x4xi32>
    %1 = tpu.iota {dimensions = array<i32: 1>} : vector<4x256xi32>
    %cst = arith.constant 0.000000e+00 : f32
    %2 = vector.broadcast %cst : f32 to vector<4x256xf32>
    %3 = vector.extract_strided_slice %0 {offsets = [0, 0], sizes = [4, 1], strides = [1, 1]} : vector<4x4xi32> to vector<4x1xi32>
    %c0_i32 = arith.constant 0 : i32
    %4 = vector.broadcast %c0_i32 : i32 to vector<4x1xi32>
    %5 = arith.cmpi sge, %3, %4 : vector<4x1xi32>
    %c64_i32 = arith.constant 64 : i32
    %6 = vector.broadcast %c64_i32 : i32 to vector<4x1xi32>
    %7 = arith.cmpi slt, %3, %6 : vector<4x1xi32>
    %8 = arith.andi %5, %7 : vector<4x1xi1>
    %c0_i32_1 = arith.constant 0 : i32
    %9 = vector.broadcast %c0_i32_1 : i32 to vector<4x1xi32>
    %10 = arith.addi %3, %9 : vector<4x1xi32>
    %11 = vector.broadcast %10 : vector<4x1xi32> to vector<4x256xi32>
    %12 = arith.cmpi eq, %1, %11 : vector<4x256xi32>
    %13 = vector.broadcast %8 : vector<4x1xi1> to vector<4x256xi1>
    %14 = arith.andi %12, %13 : vector<4x256xi1>
    %15 = arith.extui %14 : vector<4x256xi1> to vector<4x256xi32>
    %16 = arith.sitofp %15 : vector<4x256xi32> to vector<4x256xf32>
    %17 = arith.addf %2, %16 : vector<4x256xf32>
    %18 = vector.extract_strided_slice %0 {offsets = [0, 1], sizes = [4, 1], strides = [1, 1]} : vector<4x4xi32> to vector<4x1xi32>
    %c0_i32_2 = arith.constant 0 : i32
    %19 = vector.broadcast %c0_i32_2 : i32 to vector<4x1xi32>
    %20 = arith.cmpi sge, %18, %19 : vector<4x1xi32>
    %c64_i32_3 = arith.constant 64 : i32
    %21 = vector.broadcast %c64_i32_3 : i32 to vector<4x1xi32>
    %22 = arith.cmpi slt, %18, %21 : vector<4x1xi32>
    %23 = arith.andi %20, %22 : vector<4x1xi1>
    %c64_i32_4 = arith.constant 64 : i32
    %24 = vector.broadcast %c64_i32_4 : i32 to vector<4x1xi32>
    %25 = arith.addi %18, %24 : vector<4x1xi32>
    %26 = vector.broadcast %25 : vector<4x1xi32> to vector<4x256xi32>
    %27 = arith.cmpi eq, %1, %26 : vector<4x256xi32>
    %28 = vector.broadcast %23 : vector<4x1xi1> to vector<4x256xi1>
    %29 = arith.andi %27, %28 : vector<4x256xi1>
    %30 = arith.extui %29 : vector<4x256xi1> to vector<4x256xi32>
    %31 = arith.sitofp %30 : vector<4x256xi32> to vector<4x256xf32>
    %32 = arith.addf %17, %31 : vector<4x256xf32>
    %33 = vector.extract_strided_slice %0 {offsets = [0, 2], sizes = [4, 1], strides = [1, 1]} : vector<4x4xi32> to vector<4x1xi32>
    %c0_i32_5 = arith.constant 0 : i32
    %34 = vector.broadcast %c0_i32_5 : i32 to vector<4x1xi32>
    %35 = arith.cmpi sge, %33, %34 : vector<4x1xi32>
    %c64_i32_6 = arith.constant 64 : i32
    %36 = vector.broadcast %c64_i32_6 : i32 to vector<4x1xi32>
    %37 = arith.cmpi slt, %33, %36 : vector<4x1xi32>
    %38 = arith.andi %35, %37 : vector<4x1xi1>
    %c128_i32 = arith.constant 128 : i32
    %39 = vector.broadcast %c128_i32 : i32 to vector<4x1xi32>
    %40 = arith.addi %33, %39 : vector<4x1xi32>
    %41 = vector.broadcast %40 : vector<4x1xi32> to vector<4x256xi32>
    %42 = arith.cmpi eq, %1, %41 : vector<4x256xi32>
    %43 = vector.broadcast %38 : vector<4x1xi1> to vector<4x256xi1>
    %44 = arith.andi %42, %43 : vector<4x256xi1>
    %45 = arith.extui %44 : vector<4x256xi1> to vector<4x256xi32>
    %46 = arith.sitofp %45 : vector<4x256xi32> to vector<4x256xf32>
    %47 = arith.addf %32, %46 : vector<4x256xf32>
    %48 = vector.extract_strided_slice %0 {offsets = [0, 3], sizes = [4, 1], strides = [1, 1]} : vector<4x4xi32> to vector<4x1xi32>
    %c0_i32_7 = arith.constant 0 : i32
    %49 = vector.broadcast %c0_i32_7 : i32 to vector<4x1xi32>
    %50 = arith.cmpi sge, %48, %49 : vector<4x1xi32>
    %c64_i32_8 = arith.constant 64 : i32
    %51 = vector.broadcast %c64_i32_8 : i32 to vector<4x1xi32>
    %52 = arith.cmpi slt, %48, %51 : vector<4x1xi32>
    %53 = arith.andi %50, %52 : vector<4x1xi1>
    %c192_i32 = arith.constant 192 : i32
    %54 = vector.broadcast %c192_i32 : i32 to vector<4x1xi32>
    %55 = arith.addi %48, %54 : vector<4x1xi32>
    %56 = vector.broadcast %55 : vector<4x1xi32> to vector<4x256xi32>
    %57 = arith.cmpi eq, %1, %56 : vector<4x256xi32>
    %58 = vector.broadcast %53 : vector<4x1xi1> to vector<4x256xi1>
    %59 = arith.andi %57, %58 : vector<4x256xi1>
    %60 = arith.extui %59 : vector<4x256xi1> to vector<4x256xi32>
    %61 = arith.sitofp %60 : vector<4x256xi32> to vector<4x256xf32>
    %62 = arith.addf %47, %61 : vector<4x256xf32>
    %c0_9 = arith.constant 0 : index
    %c0_10 = arith.constant 0 : index
    %63 = vector.load %arg2[%c0_9, %c0_10] : memref<256x128xf32, #tpu.memory_space<vmem>>, vector<256x128xf32>
    %cst_11 = arith.constant dense<0.000000e+00> : vector<4x128xf32>
    %64 = tpu.matmul %62, %63, %cst_11 {dimension_numbers = #tpu.dot_dimension_numbers<[1], [0], [0], [1], [0, 0, 1, 1], [], []>, precision = #tpu.contract_precision<fp32>} : vector<4x256xf32>, vector<256x128xf32>, vector<4x128xf32> -> vector<4x128xf32>
    %c0_12 = arith.constant 0 : index
    %c0_13 = arith.constant 0 : index
    %65 = vector.load %arg3[%c0_12, %c0_13] : memref<4x128xf32, #tpu.memory_space<vmem>>, vector<4x128xf32>
    tpu.vector_store %arg3[%c0_12, %c0_13], %64 {strides = array<i32>} : memref<4x128xf32, #tpu.memory_space<vmem>>, vector<4x128xf32>,
    return
  }
  func.func @transform_0(%arg0: i32) -> (i32, i32) {
    %c0_i32 = arith.constant 0 : i32
    %c0_i32_0 = arith.constant 0 : i32
    return %arg0, %c0_i32 : i32, i32
  }
  func.func @transform_1(%arg0: i32) -> (i32, i32) {
    %c0_i32 = arith.constant 0 : i32
    %c0_i32_0 = arith.constant 0 : i32
    %c0_i32_1 = arith.constant 0 : i32
    return %c0_i32, %c0_i32_0 : i32, i32
  }
  func.func @transform_2(%arg0: i32) -> (i32, i32) {
    %c0_i32 = arith.constant 0 : i32
    %c0_i32_0 = arith.constant 0 : i32
    return %arg0, %c0_i32 : i32, i32
  }
}

module attributes {stable_mosaic.version = 11 : i64} {
  func.func @_token_embedding_kernel(%arg0: i32, %arg1: memref<4x4xi32, #tpu.memory_space<vmem>>, %arg2: memref<256x128xf32, #tpu.memory_space<vmem>>, %arg3: memref<4x128xf32, #tpu.memory_space<vmem>>) attributes {dimension_semantics = [#tpu.dimension_semantics<parallel>], iteration_bounds = array<i64: 1>, scalar_prefetch = 0 : i64, scratch_operands = 0 : i64, tpu.core_type = #tpu.core_type<tc>, window_params = [{transform_indices = @transform_0, window_bounds = array<i64: 4, 4>}, {pipeline_mode = #tpu.pipeline_mode<synchronous>, transform_indices = @transform_1, window_bounds = array<i64: 256, 128>}, {transform_indices = @transform_2, window_bounds = array<i64: 4, 128>}]} {
    %c0 = arith.constant 0 : index
    %c0_0 = arith.constant 0 : index
    %0 = vector.load %arg1[%c0, %c0_0] : memref<4x4xi32, #tpu.memory_space<vmem>>, vector<4x4xi32>
    %1 = tpu.iota {dimensions = array<i32: 1>} : vector<4x256xi32>
    %cst = arith.constant 0.000000e+00 : f32
    %2 = vector.broadcast %cst : f32 to vector<4x256xf32>
    %3 = vector.extract_strided_slice %0 {offsets = [0, 0], sizes = [4, 1], strides = [1, 1]} : vector<4x4xi32> to vector<4x1xi32>
    %c0_i32 = arith.constant 0 : i32
    %4 = vector.broadcast %c0_i32 : i32 to vector<4x1xi32>
    %5 = arith.cmpi sge, %3, %4 : vector<4x1xi32>
    %c64_i32 = arith.constant 64 : i32
    %6 = vector.broadcast %c64_i32 : i32 to vector<4x1xi32>
    %7 = arith.cmpi slt, %3, %6 : vector<4x1xi32>
    %8 = arith.andi %5, %7 : vector<4x1xi1>
    %c0_i32_1 = arith.constant 0 : i32
    %9 = vector.broadcast %c0_i32_1 : i32 to vector<4x1xi32>
    %10 = arith.addi %3, %9 : vector<4x1xi32>
    %11 = vector.broadcast %10 : vector<4x1xi32> to vector<4x256xi32>
    %12 = arith.cmpi eq, %1, %11 : vector<4x256xi32>
    %13 = vector.broadcast %8 : vector<4x1xi1> to vector<4x256xi1>
    %14 = arith.andi %12, %13 : vector<4x256xi1>
    %15 = arith.extui %14 : vector<4x256xi1> to vector<4x256xi32>
    %16 = arith.sitofp %15 : vector<4x256xi32> to vector<4x256xf32>
    %17 = arith.addf %2, %16 : vector<4x256xf32>
    %18 = vector.extract_strided_slice %0 {offsets = [0, 1], sizes = [4, 1], strides = [1, 1]} : vector<4x4xi32> to vector<4x1xi32>
    %c0_i32_2 = arith.constant 0 : i32
    %19 = vector.broadcast %c0_i32_2 : i32 to vector<4x1xi32>
    %20 = arith.cmpi sge, %18, %19 : vector<4x1xi32>
    %c64_i32_3 = arith.constant 64 : i32
    %21 = vector.broadcast %c64_i32_3 : i32 to vector<4x1xi32>
    %22 = arith.cmpi slt, %18, %21 : vector<4x1xi32>
    %23 = arith.andi %20, %22 : vector<4x1xi1>
    %c64_i32_4 = arith.constant 64 : i32
    %24 = vector.broadcast %c64_i32_4 : i32 to vector<4x1xi32>
    %25 = arith.addi %18, %24 : vector<4x1xi32>
    %26 = vector.broadcast %25 : vector<4x1xi32> to vector<4x256xi32>
    %27 = arith.cmpi eq, %1, %26 : vector<4x256xi32>
    %28 = vector.broadcast %23 : vector<4x1xi1> to vector<4x256xi1>
    %29 = arith.andi %27, %28 : vector<4x256xi1>
    %30 = arith.extui %29 : vector<4x256xi1> to vector<4x256xi32>
    %31 = arith.sitofp %30 : vector<4x256xi32> to vector<4x256xf32>
    %32 = arith.addf %17, %31 : vector<4x256xf32>
    %33 = vector.extract_strided_slice %0 {offsets = [0, 2], sizes = [4, 1], strides = [1, 1]} : vector<4x4xi32> to vector<4x1xi32>
    %c0_i32_5 = arith.constant 0 : i32
    %34 = vector.broadcast %c0_i32_5 : i32 to vector<4x1xi32>
    %35 = arith.cmpi sge, %33, %34 : vector<4x1xi32>
    %c64_i32_6 = arith.constant 64 : i32
    %36 = vector.broadcast %c64_i32_6 : i32 to vector<4x1xi32>
    %37 = arith.cmpi slt, %33, %36 : vector<4x1xi32>
    %38 = arith.andi %35, %37 : vector<4x1xi1>
    %c128_i32 = arith.constant 128 : i32
    %39 = vector.broadcast %c128_i32 : i32 to vector<4x1xi32>
    %40 = arith.addi %33, %39 : vector<4x1xi32>
    %41 = vector.broadcast %40 : vector<4x1xi32> to vector<4x256xi32>
    %42 = arith.cmpi eq, %1, %41 : vector<4x256xi32>
    %43 = vector.broadcast %38 : vector<4x1xi1> to vector<4x256xi1>
    %44 = arith.andi %42, %43 : vector<4x256xi1>
    %45 = arith.extui %44 : vector<4x256xi1> to vector<4x256xi32>
    %46 = arith.sitofp %45 : vector<4x256xi32> to vector<4x256xf32>
    %47 = arith.addf %32, %46 : vector<4x256xf32>
    %48 = vector.extract_strided_slice %0 {offsets = [0, 3], sizes = [4, 1], strides = [1, 1]} : vector<4x4xi32> to vector<4x1xi32>
    %c0_i32_7 = arith.constant 0 : i32
    %49 = vector.broadcast %c0_i32_7 : i32 to vector<4x1xi32>
    %50 = arith.cmpi sge, %48, %49 : vector<4x1xi32>
    %c64_i32_8 = arith.constant 64 : i32
    %51 = vector.broadcast %c64_i32_8 : i32 to vector<4x1xi32>
    %52 = arith.cmpi slt, %48, %51 : vector<4x1xi32>
    %53 = arith.andi %50, %52 : vector<4x1xi1>
    %c192_i32 = arith.constant 192 : i32
    %54 = vector.broadcast %c192_i32 : i32 to vector<4x1xi32>
    %55 = arith.addi %48, %54 : vector<4x1xi32>
    %56 = vector.broadcast %55 : vector<4x1xi32> to vector<4x256xi32>
    %57 = arith.cmpi eq, %1, %56 : vector<4x256xi32>
    %58 = vector.broadcast %53 : vector<4x1xi1> to vector<4x256xi1>
    %59 = arith.andi %57, %58 : vector<4x256xi1>
    %60 = arith.extui %59 : vector<4x256xi1> to vector<4x256xi32>
    %61 = arith.sitofp %60 : vector<4x256xi32> to vector<4x256xf32>
    %62 = arith.addf %47, %61 : vector<4x256xf32>
    %c0_9 = arith.constant 0 : index
    %c0_10 = arith.constant 0 : index
    %63 = vector.load %arg2[%c0_9, %c0_10] : memref<256x128xf32, #tpu.memory_space<vmem>>, vector<256x128xf32>
    %cst_11 = arith.constant dense<0.000000e+00> : vector<4x128xf32>
    %64 = tpu.matmul %62, %63, %cst_11 {dimension_numbers = #tpu.dot_dimension_numbers<[1], [0], [0], [1], [0, 0, 1, 1], [], []>, precision = #tpu.contract_precision<fp32>} : vector<4x256xf32>, vector<256x128xf32>, vector<4x128xf32> -> vector<4x128xf32>
    %c0_12 = arith.constant 0 : index
    %c0_13 = arith.constant 0 : index
    %65 = vector.load %arg3[%c0_12, %c0_13] : memref<4x128xf32, #tpu.memory_space<vmem>>, vector<4x128xf32>
    tpu.vector_store %arg3[%c0_12, %c0_13], %64 {strides = array<i32>} : memref<4x128xf32, #tpu.memory_space<vmem>>, vector<4x128xf32>,
    return
  }
  func.func @transform_0(%arg0: i32) -> (i32, i32) {
    %c0_i32 = arith.constant 0 : i32
    %c0_i32_0 = arith.constant 0 : i32
    return %arg0, %c0_i32 : i32, i32
  }
  func.func @transform_1(%arg0: i32) -> (i32, i32) {
    %c0_i32 = arith.constant 0 : i32
    %c0_i32_0 = arith.constant 0 : i32
    %c0_i32_1 = arith.constant 0 : i32
    return %c0_i32, %c0_i32_0 : i32, i32
  }
  func.func @transform_2(%arg0: i32) -> (i32, i32) {
    %c0_i32 = arith.constant 0 : i32
    %c0_i32_0 = arith.constant 0 : i32
    return %arg0, %c0_i32 : i32, i32
  }
}

</mosaic_0001>

<llo_original>
// kernel: tpu_custom_call.1
$region0: #{tpu_custom_call.1}
  #allocation0 [shape = 'u32[]', space=smem, size = 0x4, offset = 0x4, fixed_abs, tag = 'smem constant byte address 0x4 - core index']
  #allocation1 [shape = 'u32[144,128]{1,0:T(1,128)}', space=vmem, size = 0x12000, scoped, tag = 'internal scratch']
  %s0 = inlined_call_operand.hbm [shape: s32[4,4], index: 0, kind: input, shape index: {}]
  %s1 = inlined_call_operand.hbm [shape: f32[256,128], index: 1, kind: input, shape index: {}]
  %s2 = inlined_call_operand.hbm [shape: f32[4,128], index: 2, kind: output, shape index: {}]
  %s3 = sld [smem:[#allocation0]]
  $region26: #{tpu_custom_call.1} parent=0
    _
  %s5 = ssub.s32 1, %s3
  %s6 = scalar_select 0, %s5, %s3
  $region1: #{tpu_custom_call.1} parent=0
    #allocation2 [shape = 'u8[2048]{0}', space=vmem, size = 0x800, scoped, tag = 'input window, operand 0, single buffered']
    #allocation3 [shape = 's32[1]{0}', space=sflag, size = 0x4, scoped, tag = 'scoped memory for tpu_custom_call.1']
    #allocation4 [shape = 's32[1]{0}', space=sflag, size = 0x4, scoped, tag = 'scoped memory for tpu_custom_call.1']
    #allocation5 [shape = 'u8[131072]{0}', space=vmem, size = 0x20000, scoped, tag = 'input window, operand 1, single buffered']
    #allocation6 [shape = 's32[1]{0}', space=sflag, size = 0x4, scoped, tag = 'scoped memory for tpu_custom_call.1']
    #allocation7 [shape = 'u8[2048]{0}', space=vmem, size = 0x800, scoped, tag = 'output window, operand 0, single buffered']
    %7 = vsyncpa [#allocation3], 0
    %8 = vsyncpa [#allocation6], 0
    %9 = vsyncpa [#allocation4], 0
    // Predicated region
    $region2: #{tpu_custom_call.1} parent=1 // pred_check
      _
    $region3: #{tpu_custom_call.1} parent=1 // pred_check_branch
      %11 = sbr.rel (0) target = $region5
    $region4: #{tpu_custom_call.1} parent=1 // pred_region
      %s13 = ssub.s32 64, 64
      %14 = vsyncadd [#allocation3], %s13
      %s16 = sshll.u32 [#allocation2], 4
      %s17 = int_to_ptr.vmem [resolvable:$true] %s16
      %19 = dma.hbm_to_vmem [thread:$0]  %s0, 64, %s17, [#allocation3]
    $region5: #{tpu_custom_call.1} parent=1 // pred_fallthru
      _
    // Predicated region
    $region6: #{tpu_custom_call.1} parent=1 // pred_check
      _
    $region7: #{tpu_custom_call.1} parent=1 // pred_check_branch
      %21 = sbr.rel (0) target = $region9
    $region8: #{tpu_custom_call.1} parent=1 // pred_region
      %s23 = ssub.s32 4096, 4096
      %24 = vsyncadd [#allocation6], %s23
      %s25 = sshll.u32 [#allocation5], 4
      %s26 = int_to_ptr.vmem [resolvable:$true] %s25
      %31 = dma.hbm_to_vmem [thread:$0]  %s1, 4096, %s26, [#allocation6], 128, 128, 8
    $region9: #{tpu_custom_call.1} parent=1 // pred_fallthru
      _
    // Predicated region
    $region10: #{tpu_custom_call.1} parent=1 // pred_check
      _
    $region11: #{tpu_custom_call.1} parent=1 // pred_check_branch
      %33 = sbr.rel (0) target = $region13
    $region12: #{tpu_custom_call.1} parent=1 // pred_region
      %34 = dma.done [#allocation3], 64
    $region13: #{tpu_custom_call.1} parent=1 // pred_fallthru
      _
    // Predicated region
    $region14: #{tpu_custom_call.1} parent=1 // pred_check
      _
    $region15: #{tpu_custom_call.1} parent=1 // pred_check_branch
      %36 = sbr.rel (0) target = $region17
    $region16: #{tpu_custom_call.1} parent=1 // pred_region
      %37 = dma.done [#allocation6], 4096
    $region17: #{tpu_custom_call.1} parent=1 // pred_fallthru
      _
    %v38 = vld [vmem:[#allocation2] sm:$0xf]
    %v39 = vlaneseq
    %v40 = vand.u32 %v39, 127
    %v41 = vadd.s32 %v40, 128
    %vm42 = vcmp.ge.s32.totalorder %v38, 0
    %vm43 = vcmp.lt.s32.totalorder %v38, 64
    %vm44 = vmand %vm42, %vm43
    %45 = vset.pattern.permute.xlu0 0
    %46 = vperm.xlu0 %45, %v38
    %v47 = vpop.permute.xlu0 %46
    %vm48 = vcmp.eq.s32.totalorder %v40, %v47
    %vm49 = vcmp.eq.s32.totalorder %v41, %v47
    %v50 = vsel %vm44, 1, 0
    %51 = vset.pattern.permute.xlu0 0
    %52 = vperm.xlu0 %51, %v50
    %v53 = vpop.permute.xlu0 %52
    %vm54 = vcmp.eq.s32.totalorder %v53, 1
    %vm55 = vmand %vm48, %vm54
    %vm56 = vmand %vm49, %vm54
    %v57 = vsel %vm55, 1, 0
    %v58 = vsel %vm56, 1, 0
    %v59 = vcvt.s32.f32 %v57
    %v60 = vcvt.s32.f32 %v58
    %v61 = vadd.f32 %v59, 0.0
    %v62 = vadd.f32 %v60, 0.0
    %v63 = vadd.s32 %v38, 64
    %64 = vset.pattern.permute.xlu0 1
    %65 = vperm.xlu0 %64, %v63
    %v66 = vpop.permute.xlu0 %65
    %vm67 = vcmp.eq.s32.totalorder %v40, %v66
    %vm68 = vcmp.eq.s32.totalorder %v41, %v66
    %69 = vset.pattern.permute.xlu0 1
    %70 = vperm.xlu0 %69, %v50
    %v71 = vpop.permute.xlu0 %70
    %vm72 = vcmp.eq.s32.totalorder %v71, 1
    %vm73 = vmand %vm67, %vm72
    %vm74 = vmand %vm68, %vm72
    %v75 = vsel %vm73, 1, 0
    %v76 = vsel %vm74, 1, 0
    %v77 = vcvt.s32.f32 %v75
    %v78 = vcvt.s32.f32 %v76
    %v79 = vadd.f32 %v61, %v77
    %v80 = vadd.f32 %v62, %v78
    %v81 = vadd.s32 %v38, 128
    %82 = vset.pattern.permute.xlu0 2
    %83 = vperm.xlu0 %82, %v81
    %v84 = vpop.permute.xlu0 %83
    %vm85 = vcmp.eq.s32.totalorder %v40, %v84
    %vm86 = vcmp.eq.s32.totalorder %v41, %v84
    %87 = vset.pattern.permute.xlu0 2
    %88 = vperm.xlu0 %87, %v50
    %v89 = vpop.permute.xlu0 %88
    %vm90 = vcmp.eq.s32.totalorder %v89, 1
    %vm91 = vmand %vm85, %vm90
    %vm92 = vmand %vm86, %vm90
    %v93 = vsel %vm91, 1, 0
    %v94 = vsel %vm92, 1, 0
    %v95 = vcvt.s32.f32 %v93
    %v96 = vcvt.s32.f32 %v94
    %v97 = vadd.f32 %v79, %v95
    %v98 = vadd.f32 %v80, %v96
    %v99 = vadd.s32 %v38, 192
    %100 = vset.pattern.permute.xlu0 3
    %101 = vperm.xlu0 %100, %v99
    %v102 = vpop.permute.xlu0 %101
    %vm103 = vcmp.eq.s32.totalorder %v40, %v102
    %vm104 = vcmp.eq.s32.totalorder %v41, %v102
    %105 = vset.pattern.permute.xlu0 3
    %106 = vperm.xlu0 %105, %v50
    %v107 = vpop.permute.xlu0 %106
    %vm108 = vcmp.eq.s32.totalorder %v107, 1
    %vm109 = vmand %vm103, %vm108
    %vm110 = vmand %vm104, %vm108
    %v111 = vsel %vm109, 1, 0
    %v112 = vsel %vm110, 1, 0
    %v113 = vcvt.s32.f32 %v111
    %v114 = vcvt.s32.f32 %v112
    %v115 = vadd.f32 %v97, %v113
    %v116 = vadd.f32 %v98, %v114
    %v117 = vld [vmem:[#allocation5] sm:$0xff]
    %v118 = vld [vmem:[#allocation5 + $0x8] sm:$0xff]
    %v119 = vld [vmem:[#allocation5 + $0x10] sm:$0xff]
    %v120 = vld [vmem:[#allocation5 + $0x18] sm:$0xff]
    %v121 = vld [vmem:[#allocation5 + $0x20] sm:$0xff]
    %v122 = vld [vmem:[#allocation5 + $0x28] sm:$0xff]
    %v123 = vld [vmem:[#allocation5 + $0x30] sm:$0xff]
    %v124 = vld [vmem:[#allocation5 + $0x38] sm:$0xff]
    %v125 = vld [vmem:[#allocation5 + $0x40] sm:$0xff]
    %v126 = vld [vmem:[#allocation5 + $0x48] sm:$0xff]
    %v127 = vld [vmem:[#allocation5 + $0x50] sm:$0xff]
    %v128 = vld [vmem:[#allocation5 + $0x58] sm:$0xff]
    %v129 = vld [vmem:[#allocation5 + $0x60] sm:$0xff]
    %v130 = vld [vmem:[#allocation5 + $0x68] sm:$0xff]
    %v131 = vld [vmem:[#allocation5 + $0x70] sm:$0xff]
    %v132 = vld [vmem:[#allocation5 + $0x78] sm:$0xff]
    %v133 = vld [vmem:[#allocation5 + $0x80] sm:$0xff]
    %v134 = vld [vmem:[#allocation5 + $0x88] sm:$0xff]
    %v135 = vld [vmem:[#allocation5 + $0x90] sm:$0xff]
    %v136 = vld [vmem:[#allocation5 + $0x98] sm:$0xff]
    %v137 = vld [vmem:[#allocation5 + $0xa0] sm:$0xff]
    %v138 = vld [vmem:[#allocation5 + $0xa8] sm:$0xff]
    %v139 = vld [vmem:[#allocation5 + $0xb0] sm:$0xff]
    %v140 = vld [vmem:[#allocation5 + $0xb8] sm:$0xff]
    %v141 = vld [vmem:[#allocation5 + $0xc0] sm:$0xff]
    %v142 = vld [vmem:[#allocation5 + $0xc8] sm:$0xff]
    %v143 = vld [vmem:[#allocation5 + $0xd0] sm:$0xff]
    %v144 = vld [vmem:[#allocation5 + $0xd8] sm:$0xff]
    %v145 = vld [vmem:[#allocation5 + $0xe0] sm:$0xff]
    %v146 = vld [vmem:[#allocation5 + $0xe8] sm:$0xff]
    %v147 = vld [vmem:[#allocation5 + $0xf0] sm:$0xff]
    %v148 = vld [vmem:[#allocation5 + $0xf8] sm:$0xff]
    %149 = vmatprep.subr.mxu0 0.0
    %v150 = vand.u32 %v117, 4294901760
    %151 = vmatpush1.msra.mxu0 %v150
    %152 = vmatprep.subr.mxu0 0.0
    %v153 = vand.u32 %v118, 4294901760
    %154 = vmatpush1.msra.mxu0 %v153
    %155 = vmatprep.subr.mxu0 0.0
    %v156 = vand.u32 %v119, 4294901760
    %157 = vmatpush1.msra.mxu0 %v156
    %158 = vmatprep.subr.mxu0 0.0
    %v159 = vand.u32 %v120, 4294901760
    %160 = vmatpush1.msra.mxu0 %v159
    %161 = vmatprep.subr.mxu0 0.0
    %v162 = vand.u32 %v121, 4294901760
    %163 = vmatpush1.msra.mxu0 %v162
    %164 = vmatprep.subr.mxu0 0.0
    %v165 = vand.u32 %v122, 4294901760
    %166 = vmatpush1.msra.mxu0 %v165
    %167 = vmatprep.subr.mxu0 0.0
    %v168 = vand.u32 %v123, 4294901760
    %169 = vmatpush1.msra.mxu0 %v168
    %170 = vmatprep.subr.mxu0 0.0
    %v171 = vand.u32 %v124, 4294901760
    %172 = vmatpush1.msra.mxu0 %v171
    %173 = vmatprep.subr.mxu0 0.0
    %v174 = vand.u32 %v125, 4294901760
    %175 = vmatpush1.msra.mxu0 %v174
    %176 = vmatprep.subr.mxu0 0.0
    %v177 = vand.u32 %v126, 4294901760
    %178 = vmatpush1.msra.mxu0 %v177
    %179 = vmatprep.subr.mxu0 0.0
    %v180 = vand.u32 %v127, 4294901760
    %181 = vmatpush1.msra.mxu0 %v180
    %182 = vmatprep.subr.mxu0 0.0
    %v183 = vand.u32 %v128, 4294901760
    %184 = vmatpush1.msra.mxu0 %v183
    %185 = vmatprep.subr.mxu0 0.0
    %v186 = vand.u32 %v129, 4294901760
    %187 = vmatpush1.msra.mxu0 %v186
    %188 = vmatprep.subr.mxu0 0.0
    %v189 = vand.u32 %v130, 4294901760
    %190 = vmatpush1.msra.mxu0 %v189
    %191 = vmatprep.subr.mxu0 0.0
    %v192 = vand.u32 %v131, 4294901760
    %193 = vmatpush1.msra.mxu0 %v192
    %194 = vmatprep.subr.mxu0 0.0
    %v195 = vand.u32 %v132, 4294901760
    %196 = vmatpush1.msra.mxu0 %v195
    %197 = vmatprep.subr.mxu0 0.0
    %v198 = vand.u32 %v133, 4294901760
    %199 = vmatpush1.msra.mxu0 %v198
    %200 = vmatprep.subr.mxu0 0.0
    %v201 = vand.u32 %v134, 4294901760
    %202 = vmatpush1.msra.mxu0 %v201
    %203 = vmatprep.subr.mxu0 0.0
    %v204 = vand.u32 %v135, 4294901760
    %205 = vmatpush1.msra.mxu0 %v204
    %206 = vmatprep.subr.mxu0 0.0
    %v207 = vand.u32 %v136, 4294901760
    %208 = vmatpush1.msra.mxu0 %v207
    %209 = vmatprep.subr.mxu0 0.0
    %v210 = vand.u32 %v137, 4294901760
    %211 = vmatpush1.msra.mxu0 %v210
    %212 = vmatprep.subr.mxu0 0.0
    %v213 = vand.u32 %v138, 4294901760
    %214 = vmatpush1.msra.mxu0 %v213
    %215 = vmatprep.subr.mxu0 0.0
    %v216 = vand.u32 %v139, 4294901760
    %217 = vmatpush1.msra.mxu0 %v216
    %218 = vmatprep.subr.mxu0 0.0
    %v219 = vand.u32 %v140, 4294901760
    %220 = vmatpush1.msra.mxu0 %v219
    %221 = vmatprep.subr.mxu0 0.0
    %v222 = vand.u32 %v141, 4294901760
    %223 = vmatpush1.msra.mxu0 %v222
    %224 = vmatprep.subr.mxu0 0.0
    %v225 = vand.u32 %v142, 4294901760
    %226 = vmatpush1.msra.mxu0 %v225
    %227 = vmatprep.subr.mxu0 0.0
    %v228 = vand.u32 %v143, 4294901760
    %229 = vmatpush1.msra.mxu0 %v228
    %230 = vmatprep.subr.mxu0 0.0
    %v231 = vand.u32 %v144, 4294901760
    %232 = vmatpush1.msra.mxu0 %v231
    %233 = vmatprep.subr.mxu0 0.0
    %v234 = vand.u32 %v145, 4294901760
    %235 = vmatpush1.msra.mxu0 %v234
    %236 = vmatprep.subr.mxu0 0.0
    %v237 = vand.u32 %v146, 4294901760
    %238 = vmatpush1.msra.mxu0 %v237
    %239 = vmatprep.subr.mxu0 0.0
    %v240 = vand.u32 %v147, 4294901760
    %241 = vmatpush1.msra.mxu0 %v240
    %242 = vmatprep.subr.mxu0 0.0
    %v243 = vand.u32 %v148, 4294901760
    %244 = vmatpush1.msra.mxu0 %v243
    %v245 = vand.u32 %v116, 4294901760
    %v246 = vsub.f32 %v116, %v245
    %v247 = vand.u32 %v246, 4294901760
    %v248 = vsub.f32 %v246, %v247
    %v249 = vand.u32 %v248, 4294901760
    %250 = vmatprep.mubr.f32.mxu0 %v249
    %v251 = vand.u32 %v115, 4294901760
    %v252 = vsub.f32 %v115, %v251
    %v253 = vand.u32 %v252, 4294901760
    %v254 = vsub.f32 %v252, %v253
    %v255 = vand.u32 %v254, 4294901760
    %256 = vmatmul.mubr.f32.gmra.mrb[0].mxu0 %v255
    %v257 = vpop.f32.mrb[0].mxu0
    %v258 = vadd.f32 0.0, %v257
    %v259 = vpop.f32.mrb[0].mxu0
    %260 = vdwg.mxu0
    %261 = vmatprep.subr.mxu0 0.0
    %v262 = vand.u32 %v117, 4294901760
    %v263 = vsub.f32 %v117, %v262
    %v264 = vand.u32 %v263, 4294901760
    %v265 = vsub.f32 %v263, %v264
    %v266 = vand.u32 %v265, 4294901760
    %267 = vmatpush1.msra.mxu0 %v266
    %268 = vmatprep.subr.mxu0 0.0
    %v269 = vand.u32 %v118, 4294901760
    %v270 = vsub.f32 %v118, %v269
    %v271 = vand.u32 %v270, 4294901760
    %v272 = vsub.f32 %v270, %v271
    %v273 = vand.u32 %v272, 4294901760
    %274 = vmatpush1.msra.mxu0 %v273
    %275 = vmatprep.subr.mxu0 0.0
    %v276 = vand.u32 %v119, 4294901760
    %v277 = vsub.f32 %v119, %v276
    %v278 = vand.u32 %v277, 4294901760
    %v279 = vsub.f32 %v277, %v278
    %v280 = vand.u32 %v279, 4294901760
    %281 = vmatpush1.msra.mxu0 %v280
    %282 = vmatprep.subr.mxu0 0.0
    %v283 = vand.u32 %v120, 4294901760
    %v284 = vsub.f32 %v120, %v283
    %v285 = vand.u32 %v284, 4294901760
    %v286 = vsub.f32 %v284, %v285
    %v287 = vand.u32 %v286, 4294901760
    %288 = vmatpush1.msra.mxu0 %v287
    %289 = vmatprep.subr.mxu0 0.0
    %v290 = vand.u32 %v121, 4294901760
    %v291 = vsub.f32 %v121, %v290
    %v292 = vand.u32 %v291, 4294901760
    %v293 = vsub.f32 %v291, %v292
    %v294 = vand.u32 %v293, 4294901760
    %295 = vmatpush1.msra.mxu0 %v294
    %296 = vmatprep.subr.mxu0 0.0
    %v297 = vand.u32 %v122, 4294901760
    %v298 = vsub.f32 %v122, %v297
    %v299 = vand.u32 %v298, 4294901760
    %v300 = vsub.f32 %v298, %v299
    %v301 = vand.u32 %v300, 4294901760
    %302 = vmatpush1.msra.mxu0 %v301
    %303 = vmatprep.subr.mxu0 0.0
    %v304 = vand.u32 %v123, 4294901760
    %v305 = vsub.f32 %v123, %v304
    %v306 = vand.u32 %v305, 4294901760
    %v307 = vsub.f32 %v305, %v306
    %v308 = vand.u32 %v307, 4294901760
    %309 = vmatpush1.msra.mxu0 %v308
    %310 = vmatprep.subr.mxu0 0.0
    %v311 = vand.u32 %v124, 4294901760
    %v312 = vsub.f32 %v124, %v311
    %v313 = vand.u32 %v312, 4294901760
    %v314 = vsub.f32 %v312, %v313
    %v315 = vand.u32 %v314, 4294901760
    %316 = vmatpush1.msra.mxu0 %v315
    %317 = vmatprep.subr.mxu0 0.0
    %v318 = vand.u32 %v125, 4294901760
    %v319 = vsub.f32 %v125, %v318
    %v320 = vand.u32 %v319, 4294901760
    %v321 = vsub.f32 %v319, %v320
    %v322 = vand.u32 %v321, 4294901760
    %323 = vmatpush1.msra.mxu0 %v322
    %324 = vmatprep.subr.mxu0 0.0
    %v325 = vand.u32 %v126, 4294901760
    %v326 = vsub.f32 %v126, %v325
    %v327 = vand.u32 %v326, 4294901760
    %v328 = vsub.f32 %v326, %v327
    %v329 = vand.u32 %v328, 4294901760
    %330 = vmatpush1.msra.mxu0 %v329
    %331 = vmatprep.subr.mxu0 0.0
    %v332 = vand.u32 %v127, 4294901760
    %v333 = vsub.f32 %v127, %v332
    %v334 = vand.u32 %v333, 4294901760
    %v335 = vsub.f32 %v333, %v334
    %v336 = vand.u32 %v335, 4294901760
    %337 = vmatpush1.msra.mxu0 %v336
    %338 = vmatprep.subr.mxu0 0.0
    %v339 = vand.u32 %v128, 4294901760
    %v340 = vsub.f32 %v128, %v339
    %v341 = vand.u32 %v340, 4294901760
    %v342 = vsub.f32 %v340, %v341
    %v343 = vand.u32 %v342, 4294901760
    %344 = vmatpush1.msra.mxu0 %v343
    %345 = vmatprep.subr.mxu0 0.0
    %v346 = vand.u32 %v129, 4294901760
    %v347 = vsub.f32 %v129, %v346
    %v348 = vand.u32 %v347, 4294901760
    %v349 = vsub.f32 %v347, %v348
    %v350 = vand.u32 %v349, 4294901760
    %351 = vmatpush1.msra.mxu0 %v350
    %352 = vmatprep.subr.mxu0 0.0
    %v353 = vand.u32 %v130, 4294901760
    %v354 = vsub.f32 %v130, %v353
    %v355 = vand.u32 %v354, 4294901760
    %v356 = vsub.f32 %v354, %v355
    %v357 = vand.u32 %v356, 4294901760
    %358 = vmatpush1.msra.mxu0 %v357
    %359 = vmatprep.subr.mxu0 0.0
    %v360 = vand.u32 %v131, 4294901760
    %v361 = vsub.f32 %v131, %v360
    %v362 = vand.u32 %v361, 4294901760
    %v363 = vsub.f32 %v361, %v362
    %v364 = vand.u32 %v363, 4294901760
    %365 = vmatpush1.msra.mxu0 %v364
    %366 = vmatprep.subr.mxu0 0.0
    %v367 = vand.u32 %v132, 4294901760
    %v368 = vsub.f32 %v132, %v367
    %v369 = vand.u32 %v368, 4294901760
    %v370 = vsub.f32 %v368, %v369
    %v371 = vand.u32 %v370, 4294901760
    %372 = vmatpush1.msra.mxu0 %v371
    %373 = vmatprep.subr.mxu0 0.0
    %v374 = vand.u32 %v133, 4294901760
    %v375 = vsub.f32 %v133, %v374
    %v376 = vand.u32 %v375, 4294901760
    %v377 = vsub.f32 %v375, %v376
    %v378 = vand.u32 %v377, 4294901760
    %379 = vmatpush1.msra.mxu0 %v378
    %380 = vmatprep.subr.mxu0 0.0
    %v381 = vand.u32 %v134, 4294901760
    %v382 = vsub.f32 %v134, %v381
    %v383 = vand.u32 %v382, 4294901760
    %v384 = vsub.f32 %v382, %v383
    %v385 = vand.u32 %v384, 4294901760
    %386 = vmatpush1.msra.mxu0 %v385
    %387 = vmatprep.subr.mxu0 0.0
    %v388 = vand.u32 %v135, 4294901760
    %v389 = vsub.f32 %v135, %v388
    %v390 = vand.u32 %v389, 4294901760
    %v391 = vsub.f32 %v389, %v390
    %v392 = vand.u32 %v391, 4294901760
    %393 = vmatpush1.msra.mxu0 %v392
    %394 = vmatprep.subr.mxu0 0.0
    %v395 = vand.u32 %v136, 4294901760
    %v396 = vsub.f32 %v136, %v395
    %v397 = vand.u32 %v396, 4294901760
    %v398 = vsub.f32 %v396, %v397
    %v399 = vand.u32 %v398, 4294901760
    %400 = vmatpush1.msra.mxu0 %v399
    %401 = vmatprep.subr.mxu0 0.0
    %v402 = vand.u32 %v137, 4294901760
    %v403 = vsub.f32 %v137, %v402
    %v404 = vand.u32 %v403, 4294901760
    %v405 = vsub.f32 %v403, %v404
    %v406 = vand.u32 %v405, 4294901760
    %407 = vmatpush1.msra.mxu0 %v406
    %408 = vmatprep.subr.mxu0 0.0
    %v409 = vand.u32 %v138, 4294901760
    %v410 = vsub.f32 %v138, %v409
    %v411 = vand.u32 %v410, 4294901760
    %v412 = vsub.f32 %v410, %v411
    %v413 = vand.u32 %v412, 4294901760
    %414 = vmatpush1.msra.mxu0 %v413
    %415 = vmatprep.subr.mxu0 0.0
    %v416 = vand.u32 %v139, 4294901760
    %v417 = vsub.f32 %v139, %v416
    %v418 = vand.u32 %v417, 4294901760
    %v419 = vsub.f32 %v417, %v418
    %v420 = vand.u32 %v419, 4294901760
    %421 = vmatpush1.msra.mxu0 %v420
    %422 = vmatprep.subr.mxu0 0.0
    %v423 = vand.u32 %v140, 4294901760
    %v424 = vsub.f32 %v140, %v423
    %v425 = vand.u32 %v424, 4294901760
    %v426 = vsub.f32 %v424, %v425
    %v427 = vand.u32 %v426, 4294901760
    %428 = vmatpush1.msra.mxu0 %v427
    %429 = vmatprep.subr.mxu0 0.0
    %v430 = vand.u32 %v141, 4294901760
    %v431 = vsub.f32 %v141, %v430
    %v432 = vand.u32 %v431, 4294901760
    %v433 = vsub.f32 %v431, %v432
    %v434 = vand.u32 %v433, 4294901760
    %435 = vmatpush1.msra.mxu0 %v434
    %436 = vmatprep.subr.mxu0 0.0
    %v437 = vand.u32 %v142, 4294901760
    %v438 = vsub.f32 %v142, %v437
    %v439 = vand.u32 %v438, 4294901760
    %v440 = vsub.f32 %v438, %v439
    %v441 = vand.u32 %v440, 4294901760
    %442 = vmatpush1.msra.mxu0 %v441
    %443 = vmatprep.subr.mxu0 0.0
    %v444 = vand.u32 %v143, 4294901760
    %v445 = vsub.f32 %v143, %v444
    %v446 = vand.u32 %v445, 4294901760
    %v447 = vsub.f32 %v445, %v446
    %v448 = vand.u32 %v447, 4294901760
    %449 = vmatpush1.msra.mxu0 %v448
    %450 = vmatprep.subr.mxu0 0.0
    %v451 = vand.u32 %v144, 4294901760
    %v452 = vsub.f32 %v144, %v451
    %v453 = vand.u32 %v452, 4294901760
    %v454 = vsub.f32 %v452, %v453
    %v455 = vand.u32 %v454, 4294901760
    %456 = vmatpush1.msra.mxu0 %v455
    %457 = vmatprep.subr.mxu0 0.0
    %v458 = vand.u32 %v145, 4294901760
    %v459 = vsub.f32 %v145, %v458
    %v460 = vand.u32 %v459, 4294901760
    %v461 = vsub.f32 %v459, %v460
    %v462 = vand.u32 %v461, 4294901760
    %463 = vmatpush1.msra.mxu0 %v462
    %464 = vmatprep.subr.mxu0 0.0
    %v465 = vand.u32 %v146, 4294901760
    %v466 = vsub.f32 %v146, %v465
    %v467 = vand.u32 %v466, 4294901760
    %v468 = vsub.f32 %v466, %v467
    %v469 = vand.u32 %v468, 4294901760
    %470 = vmatpush1.msra.mxu0 %v469
    %471 = vmatprep.subr.mxu0 0.0
    %v472 = vand.u32 %v147, 4294901760
    %v473 = vsub.f32 %v147, %v472
    %v474 = vand.u32 %v473, 4294901760
    %v475 = vsub.f32 %v473, %v474
    %v476 = vand.u32 %v475, 4294901760
    %477 = vmatpush1.msra.mxu0 %v476
    %478 = vmatprep.subr.mxu0 0.0
    %v479 = vand.u32 %v148, 4294901760
    %v480 = vsub.f32 %v148, %v479
    %v481 = vand.u32 %v480, 4294901760
    %v482 = vsub.f32 %v480, %v481
    %v483 = vand.u32 %v482, 4294901760
    %484 = vmatpush1.msra.mxu0 %v483
    %v485 = vand.u32 %v116, 4294901760
    %486 = vmatprep.mubr.f32.mxu0 %v485
    %v487 = vand.u32 %v115, 4294901760
    %488 = vmatmul.mubr.f32.gmra.mrb[0].mxu0 %v487
    %v489 = vpop.f32.mrb[0].mxu0
    %v490 = vadd.f32 %v258, %v489
    %v491 = vpop.f32.mrb[0].mxu0
    %492 = vdwg.mxu0
    %493 = vmatprep.subr.mxu0 0.0
    %v494 = vand.u32 %v117, 4294901760
    %v495 = vsub.f32 %v117, %v494
    %496 = vmatpush1.msra.mxu0 %v495
    %497 = vmatprep.subr.mxu0 0.0
    %v498 = vand.u32 %v118, 4294901760
    %v499 = vsub.f32 %v118, %v498
    %500 = vmatpush1.msra.mxu0 %v499
    %501 = vmatprep.subr.mxu0 0.0
    %v502 = vand.u32 %v119, 4294901760
    %v503 = vsub.f32 %v119, %v502
    %504 = vmatpush1.msra.mxu0 %v503
    %505 = vmatprep.subr.mxu0 0.0
    %v506 = vand.u32 %v120, 4294901760
    %v507 = vsub.f32 %v120, %v506
    %508 = vmatpush1.msra.mxu0 %v507
    %509 = vmatprep.subr.mxu0 0.0
    %v510 = vand.u32 %v121, 4294901760
    %v511 = vsub.f32 %v121, %v510
    %512 = vmatpush1.msra.mxu0 %v511
    %513 = vmatprep.subr.mxu0 0.0
    %v514 = vand.u32 %v122, 4294901760
    %v515 = vsub.f32 %v122, %v514
    %516 = vmatpush1.msra.mxu0 %v515
    %517 = vmatprep.subr.mxu0 0.0
    %v518 = vand.u32 %v123, 4294901760
    %v519 = vsub.f32 %v123, %v518
    %520 = vmatpush1.msra.mxu0 %v519
    %521 = vmatprep.subr.mxu0 0.0
    %v522 = vand.u32 %v124, 4294901760
    %v523 = vsub.f32 %v124, %v522
    %524 = vmatpush1.msra.mxu0 %v523
    %525 = vmatprep.subr.mxu0 0.0
    %v526 = vand.u32 %v125, 4294901760
    %v527 = vsub.f32 %v125, %v526
    %528 = vmatpush1.msra.mxu0 %v527
    %529 = vmatprep.subr.mxu0 0.0
    %v530 = vand.u32 %v126, 4294901760
    %v531 = vsub.f32 %v126, %v530
    %532 = vmatpush1.msra.mxu0 %v531
    %533 = vmatprep.subr.mxu0 0.0
    %v534 = vand.u32 %v127, 4294901760
    %v535 = vsub.f32 %v127, %v534
    %536 = vmatpush1.msra.mxu0 %v535
    %537 = vmatprep.subr.mxu0 0.0
    %v538 = vand.u32 %v128, 4294901760
    %v539 = vsub.f32 %v128, %v538
    %540 = vmatpush1.msra.mxu0 %v539
    %541 = vmatprep.subr.mxu0 0.0
    %v542 = vand.u32 %v129, 4294901760
    %v543 = vsub.f32 %v129, %v542
    %544 = vmatpush1.msra.mxu0 %v543
    %545 = vmatprep.subr.mxu0 0.0
    %v546 = vand.u32 %v130, 4294901760
    %v547 = vsub.f32 %v130, %v546
    %548 = vmatpush1.msra.mxu0 %v547
    %549 = vmatprep.subr.mxu0 0.0
    %v550 = vand.u32 %v131, 4294901760
    %v551 = vsub.f32 %v131, %v550
    %552 = vmatpush1.msra.mxu0 %v551
    %553 = vmatprep.subr.mxu0 0.0
    %v554 = vand.u32 %v132, 4294901760
    %v555 = vsub.f32 %v132, %v554
    %556 = vmatpush1.msra.mxu0 %v555
    %557 = vmatprep.subr.mxu0 0.0
    %v558 = vand.u32 %v133, 4294901760
    %v559 = vsub.f32 %v133, %v558
    %560 = vmatpush1.msra.mxu0 %v559
    %561 = vmatprep.subr.mxu0 0.0
    %v562 = vand.u32 %v134, 4294901760
    %v563 = vsub.f32 %v134, %v562
    %564 = vmatpush1.msra.mxu0 %v563
    %565 = vmatprep.subr.mxu0 0.0
    %v566 = vand.u32 %v135, 4294901760
    %v567 = vsub.f32 %v135, %v566
    %568 = vmatpush1.msra.mxu0 %v567
    %569 = vmatprep.subr.mxu0 0.0
    %v570 = vand.u32 %v136, 4294901760
    %v571 = vsub.f32 %v136, %v570
    %572 = vmatpush1.msra.mxu0 %v571
    %573 = vmatprep.subr.mxu0 0.0
    %v574 = vand.u32 %v137, 4294901760
    %v575 = vsub.f32 %v137, %v574
    %576 = vmatpush1.msra.mxu0 %v575
    %577 = vmatprep.subr.mxu0 0.0
    %v578 = vand.u32 %v138, 4294901760
    %v579 = vsub.f32 %v138, %v578
    %580 = vmatpush1.msra.mxu0 %v579
    %581 = vmatprep.subr.mxu0 0.0
    %v582 = vand.u32 %v139, 4294901760
    %v583 = vsub.f32 %v139, %v582
    %584 = vmatpush1.msra.mxu0 %v583
    %585 = vmatprep.subr.mxu0 0.0
    %v586 = vand.u32 %v140, 4294901760
    %v587 = vsub.f32 %v140, %v586
    %588 = vmatpush1.msra.mxu0 %v587
    %589 = vmatprep.subr.mxu0 0.0
    %v590 = vand.u32 %v141, 4294901760
    %v591 = vsub.f32 %v141, %v590
    %592 = vmatpush1.msra.mxu0 %v591
    %593 = vmatprep.subr.mxu0 0.0
    %v594 = vand.u32 %v142, 4294901760
    %v595 = vsub.f32 %v142, %v594
    %596 = vmatpush1.msra.mxu0 %v595
    %597 = vmatprep.subr.mxu0 0.0
    %v598 = vand.u32 %v143, 4294901760
    %v599 = vsub.f32 %v143, %v598
    %600 = vmatpush1.msra.mxu0 %v599
    %601 = vmatprep.subr.mxu0 0.0
    %v602 = vand.u32 %v144, 4294901760
    %v603 = vsub.f32 %v144, %v602
    %604 = vmatpush1.msra.mxu0 %v603
    %605 = vmatprep.subr.mxu0 0.0
    %v606 = vand.u32 %v145, 4294901760
    %v607 = vsub.f32 %v145, %v606
    %608 = vmatpush1.msra.mxu0 %v607
    %609 = vmatprep.subr.mxu0 0.0
    %v610 = vand.u32 %v146, 4294901760
    %v611 = vsub.f32 %v146, %v610
    %612 = vmatpush1.msra.mxu0 %v611
    %613 = vmatprep.subr.mxu0 0.0
    %v614 = vand.u32 %v147, 4294901760
    %v615 = vsub.f32 %v147, %v614
    %616 = vmatpush1.msra.mxu0 %v615
    %617 = vmatprep.subr.mxu0 0.0
    %v618 = vand.u32 %v148, 4294901760
    %v619 = vsub.f32 %v148, %v618
    %620 = vmatpush1.msra.mxu0 %v619
    %v621 = vand.u32 %v116, 4294901760
    %v622 = vsub.f32 %v116, %v621
    %623 = vmatprep.mubr.f32.mxu0 %v622
    %v624 = vand.u32 %v115, 4294901760
    %v625 = vsub.f32 %v115, %v624
    %626 = vmatmul.mubr.f32.gmra.mrb[0].mxu0 %v625
    %v627 = vpop.f32.mrb[0].mxu0
    %v628 = vadd.f32 %v490, %v627
    %v629 = vpop.f32.mrb[0].mxu0
    %630 = vdwg.mxu0
    %631 = vmatprep.subr.mxu0 0.0
    %v632 = vand.u32 %v117, 4294901760
    %633 = vmatpush1.msra.mxu0 %v632
    %634 = vmatprep.subr.mxu0 0.0
    %v635 = vand.u32 %v118, 4294901760
    %636 = vmatpush1.msra.mxu0 %v635
    %637 = vmatprep.subr.mxu0 0.0
    %v638 = vand.u32 %v119, 4294901760
    %639 = vmatpush1.msra.mxu0 %v638
    %640 = vmatprep.subr.mxu0 0.0
    %v641 = vand.u32 %v120, 4294901760
    %642 = vmatpush1.msra.mxu0 %v641
    %643 = vmatprep.subr.mxu0 0.0
    %v644 = vand.u32 %v121, 4294901760
    %645 = vmatpush1.msra.mxu0 %v644
    %646 = vmatprep.subr.mxu0 0.0
    %v647 = vand.u32 %v122, 4294901760
    %648 = vmatpush1.msra.mxu0 %v647
    %649 = vmatprep.subr.mxu0 0.0
    %v650 = vand.u32 %v123, 4294901760
    %651 = vmatpush1.msra.mxu0 %v650
    %652 = vmatprep.subr.mxu0 0.0
    %v653 = vand.u32 %v124, 4294901760
    %654 = vmatpush1.msra.mxu0 %v653
    %655 = vmatprep.subr.mxu0 0.0
    %v656 = vand.u32 %v125, 4294901760
    %657 = vmatpush1.msra.mxu0 %v656
    %658 = vmatprep.subr.mxu0 0.0
    %v659 = vand.u32 %v126, 4294901760
    %660 = vmatpush1.msra.mxu0 %v659
    %661 = vmatprep.subr.mxu0 0.0
    %v662 = vand.u32 %v127, 4294901760
    %663 = vmatpush1.msra.mxu0 %v662
    %664 = vmatprep.subr.mxu0 0.0
    %v665 = vand.u32 %v128, 4294901760
    %666 = vmatpush1.msra.mxu0 %v665
    %667 = vmatprep.subr.mxu0 0.0
    %v668 = vand.u32 %v129, 4294901760
    %669 = vmatpush1.msra.mxu0 %v668
    %670 = vmatprep.subr.mxu0 0.0
    %v671 = vand.u32 %v130, 4294901760
    %672 = vmatpush1.msra.mxu0 %v671
    %673 = vmatprep.subr.mxu0 0.0
    %v674 = vand.u32 %v131, 4294901760
    %675 = vmatpush1.msra.mxu0 %v674
    %676 = vmatprep.subr.mxu0 0.0
    %v677 = vand.u32 %v132, 4294901760
    %678 = vmatpush1.msra.mxu0 %v677
    %679 = vmatprep.subr.mxu0 0.0
    %v680 = vand.u32 %v133, 4294901760
    %681 = vmatpush1.msra.mxu0 %v680
    %682 = vmatprep.subr.mxu0 0.0
    %v683 = vand.u32 %v134, 4294901760
    %684 = vmatpush1.msra.mxu0 %v683
    %685 = vmatprep.subr.mxu0 0.0
    %v686 = vand.u32 %v135, 4294901760
    %687 = vmatpush1.msra.mxu0 %v686
    %688 = vmatprep.subr.mxu0 0.0
    %v689 = vand.u32 %v136, 4294901760
    %690 = vmatpush1.msra.mxu0 %v689
    %691 = vmatprep.subr.mxu0 0.0
    %v692 = vand.u32 %v137, 4294901760
    %693 = vmatpush1.msra.mxu0 %v692
    %694 = vmatprep.subr.mxu0 0.0
    %v695 = vand.u32 %v138, 4294901760
    %696 = vmatpush1.msra.mxu0 %v695
    %697 = vmatprep.subr.mxu0 0.0
    %v698 = vand.u32 %v139, 4294901760
    %699 = vmatpush1.msra.mxu0 %v698
    %700 = vmatprep.subr.mxu0 0.0
    %v701 = vand.u32 %v140, 4294901760
    %702 = vmatpush1.msra.mxu0 %v701
    %703 = vmatprep.subr.mxu0 0.0
    %v704 = vand.u32 %v141, 4294901760
    %705 = vmatpush1.msra.mxu0 %v704
    %706 = vmatprep.subr.mxu0 0.0
    %v707 = vand.u32 %v142, 4294901760
    %708 = vmatpush1.msra.mxu0 %v707
    %709 = vmatprep.subr.mxu0 0.0
    %v710 = vand.u32 %v143, 4294901760
    %711 = vmatpush1.msra.mxu0 %v710
    %712 = vmatprep.subr.mxu0 0.0
    %v713 = vand.u32 %v144, 4294901760
    %714 = vmatpush1.msra.mxu0 %v713
    %715 = vmatprep.subr.mxu0 0.0
    %v716 = vand.u32 %v145, 4294901760
    %717 = vmatpush1.msra.mxu0 %v716
    %718 = vmatprep.subr.mxu0 0.0
    %v719 = vand.u32 %v146, 4294901760
    %720 = vmatpush1.msra.mxu0 %v719
    %721 = vmatprep.subr.mxu0 0.0
    %v722 = vand.u32 %v147, 4294901760
    %723 = vmatpush1.msra.mxu0 %v722
    %724 = vmatprep.subr.mxu0 0.0
    %v725 = vand.u32 %v148, 4294901760
    %726 = vmatpush1.msra.mxu0 %v725
    %v727 = vand.u32 %v116, 4294901760
    %v728 = vsub.f32 %v116, %v727
    %v729 = vand.u32 %v728, 4294901760
    %730 = vmatprep.mubr.f32.mxu0 %v729
    %v731 = vand.u32 %v115, 4294901760
    %v732 = vsub.f32 %v115, %v731
    %v733 = vand.u32 %v732, 4294901760
    %734 = vmatmul.mubr.f32.gmra.mrb[0].mxu0 %v733
    %v735 = vpop.f32.mrb[0].mxu0
    %v736 = vadd.f32 %v628, %v735
    %v737 = vpop.f32.mrb[0].mxu0
    %738 = vdwg.mxu0
    %739 = vmatprep.subr.mxu0 0.0
    %v740 = vand.u32 %v117, 4294901760
    %v741 = vsub.f32 %v117, %v740
    %v742 = vand.u32 %v741, 4294901760
    %743 = vmatpush1.msra.mxu0 %v742
    %744 = vmatprep.subr.mxu0 0.0
    %v745 = vand.u32 %v118, 4294901760
    %v746 = vsub.f32 %v118, %v745
    %v747 = vand.u32 %v746, 4294901760
    %748 = vmatpush1.msra.mxu0 %v747
    %749 = vmatprep.subr.mxu0 0.0
    %v750 = vand.u32 %v119, 4294901760
    %v751 = vsub.f32 %v119, %v750
    %v752 = vand.u32 %v751, 4294901760
    %753 = vmatpush1.msra.mxu0 %v752
    %754 = vmatprep.subr.mxu0 0.0
    %v755 = vand.u32 %v120, 4294901760
    %v756 = vsub.f32 %v120, %v755
    %v757 = vand.u32 %v756, 4294901760
    %758 = vmatpush1.msra.mxu0 %v757
    %759 = vmatprep.subr.mxu0 0.0
    %v760 = vand.u32 %v121, 4294901760
    %v761 = vsub.f32 %v121, %v760
    %v762 = vand.u32 %v761, 4294901760
    %763 = vmatpush1.msra.mxu0 %v762
    %764 = vmatprep.subr.mxu0 0.0
    %v765 = vand.u32 %v122, 4294901760
    %v766 = vsub.f32 %v122, %v765
    %v767 = vand.u32 %v766, 4294901760
    %768 = vmatpush1.msra.mxu0 %v767
    %769 = vmatprep.subr.mxu0 0.0
    %v770 = vand.u32 %v123, 4294901760
    %v771 = vsub.f32 %v123, %v770
    %v772 = vand.u32 %v771, 4294901760
    %773 = vmatpush1.msra.mxu0 %v772
    %774 = vmatprep.subr.mxu0 0.0
    %v775 = vand.u32 %v124, 4294901760
    %v776 = vsub.f32 %v124, %v775
    %v777 = vand.u32 %v776, 4294901760
    %778 = vmatpush1.msra.mxu0 %v777
    %779 = vmatprep.subr.mxu0 0.0
    %v780 = vand.u32 %v125, 4294901760
    %v781 = vsub.f32 %v125, %v780
    %v782 = vand.u32 %v781, 4294901760
    %783 = vmatpush1.msra.mxu0 %v782
    %784 = vmatprep.subr.mxu0 0.0
    %v785 = vand.u32 %v126, 4294901760
    %v786 = vsub.f32 %v126, %v785
    %v787 = vand.u32 %v786, 4294901760
    %788 = vmatpush1.msra.mxu0 %v787
    %789 = vmatprep.subr.mxu0 0.0
    %v790 = vand.u32 %v127, 4294901760
    %v791 = vsub.f32 %v127, %v790
    %v792 = vand.u32 %v791, 4294901760
    %793 = vmatpush1.msra.mxu0 %v792
    %794 = vmatprep.subr.mxu0 0.0
    %v795 = vand.u32 %v128, 4294901760
    %v796 = vsub.f32 %v128, %v795
    %v797 = vand.u32 %v796, 4294901760
    %798 = vmatpush1.msra.mxu0 %v797
    %799 = vmatprep.subr.mxu0 0.0
    %v800 = vand.u32 %v129, 4294901760
    %v801 = vsub.f32 %v129, %v800
    %v802 = vand.u32 %v801, 4294901760
    %803 = vmatpush1.msra.mxu0 %v802
    %804 = vmatprep.subr.mxu0 0.0
    %v805 = vand.u32 %v130, 4294901760
    %v806 = vsub.f32 %v130, %v805
    %v807 = vand.u32 %v806, 4294901760
    %808 = vmatpush1.msra.mxu0 %v807
    %809 = vmatprep.subr.mxu0 0.0
    %v810 = vand.u32 %v131, 4294901760
    %v811 = vsub.f32 %v131, %v810
    %v812 = vand.u32 %v811, 4294901760
    %813 = vmatpush1.msra.mxu0 %v812
    %814 = vmatprep.subr.mxu0 0.0
    %v815 = vand.u32 %v132, 4294901760
    %v816 = vsub.f32 %v132, %v815
    %v817 = vand.u32 %v816, 4294901760
    %818 = vmatpush1.msra.mxu0 %v817
    %819 = vmatprep.subr.mxu0 0.0
    %v820 = vand.u32 %v133, 4294901760
    %v821 = vsub.f32 %v133, %v820
    %v822 = vand.u32 %v821, 4294901760
    %823 = vmatpush1.msra.mxu0 %v822
    %824 = vmatprep.subr.mxu0 0.0
    %v825 = vand.u32 %v134, 4294901760
    %v826 = vsub.f32 %v134, %v825
    %v827 = vand.u32 %v826, 4294901760
    %828 = vmatpush1.msra.mxu0 %v827
    %829 = vmatprep.subr.mxu0 0.0
    %v830 = vand.u32 %v135, 4294901760
    %v831 = vsub.f32 %v135, %v830
    %v832 = vand.u32 %v831, 4294901760
    %833 = vmatpush1.msra.mxu0 %v832
    %834 = vmatprep.subr.mxu0 0.0
    %v835 = vand.u32 %v136, 4294901760
    %v836 = vsub.f32 %v136, %v835
    %v837 = vand.u32 %v836, 4294901760
    %838 = vmatpush1.msra.mxu0 %v837
    %839 = vmatprep.subr.mxu0 0.0
    %v840 = vand.u32 %v137, 4294901760
    %v841 = vsub.f32 %v137, %v840
    %v842 = vand.u32 %v841, 4294901760
    %843 = vmatpush1.msra.mxu0 %v842
    %844 = vmatprep.subr.mxu0 0.0
    %v845 = vand.u32 %v138, 4294901760
    %v846 = vsub.f32 %v138, %v845
    %v847 = vand.u32 %v846, 4294901760
    %848 = vmatpush1.msra.mxu0 %v847
    %849 = vmatprep.subr.mxu0 0.0
    %v850 = vand.u32 %v139, 4294901760
    %v851 = vsub.f32 %v139, %v850
    %v852 = vand.u32 %v851, 4294901760
    %853 = vmatpush1.msra.mxu0 %v852
    %854 = vmatprep.subr.mxu0 0.0
    %v855 = vand.u32 %v140, 4294901760
    %v856 = vsub.f32 %v140, %v855
    %v857 = vand.u32 %v856, 4294901760
    %858 = vmatpush1.msra.mxu0 %v857
    %859 = vmatprep.subr.mxu0 0.0
    %v860 = vand.u32 %v141, 4294901760
    %v861 = vsub.f32 %v141, %v860
    %v862 = vand.u32 %v861, 4294901760
    %863 = vmatpush1.msra.mxu0 %v862
    %864 = vmatprep.subr.mxu0 0.0
    %v865 = vand.u32 %v142, 4294901760
    %v866 = vsub.f32 %v142, %v865
    %v867 = vand.u32 %v866, 4294901760
    %868 = vmatpush1.msra.mxu0 %v867
    %869 = vmatprep.subr.mxu0 0.0
    %v870 = vand.u32 %v143, 4294901760
    %v871 = vsub.f32 %v143, %v870
    %v872 = vand.u32 %v871, 4294901760
    %873 = vmatpush1.msra.mxu0 %v872
    %874 = vmatprep.subr.mxu0 0.0
    %v875 = vand.u32 %v144, 4294901760
    %v876 = vsub.f32 %v144, %v875
    %v877 = vand.u32 %v876, 4294901760
    %878 = vmatpush1.msra.mxu0 %v877
    %879 = vmatprep.subr.mxu0 0.0
    %v880 = vand.u32 %v145, 4294901760
    %v881 = vsub.f32 %v145, %v880
    %v882 = vand.u32 %v881, 4294901760
    %883 = vmatpush1.msra.mxu0 %v882
    %884 = vmatprep.subr.mxu0 0.0
    %v885 = vand.u32 %v146, 4294901760
    %v886 = vsub.f32 %v146, %v885
    %v887 = vand.u32 %v886, 4294901760
    %888 = vmatpush1.msra.mxu0 %v887
    %889 = vmatprep.subr.mxu0 0.0
    %v890 = vand.u32 %v147, 4294901760
    %v891 = vsub.f32 %v147, %v890
    %v892 = vand.u32 %v891, 4294901760
    %893 = vmatpush1.msra.mxu0 %v892
    %894 = vmatprep.subr.mxu0 0.0
    %v895 = vand.u32 %v148, 4294901760
    %v896 = vsub.f32 %v148, %v895
    %v897 = vand.u32 %v896, 4294901760
    %898 = vmatpush1.msra.mxu0 %v897
    %v899 = vand.u32 %v116, 4294901760
    %900 = vmatprep.mubr.f32.mxu0 %v899
    %v901 = vand.u32 %v115, 4294901760
    %902 = vmatmul.mubr.f32.gmra.mrb[0].mxu0 %v901
    %v903 = vpop.f32.mrb[0].mxu0
    %v904 = vadd.f32 %v736, %v903
    %v905 = vpop.f32.mrb[0].mxu0
    %906 = vdwg.mxu0
    %907 = vmatprep.subr.mxu0 0.0
    %v908 = vand.u32 %v117, 4294901760
    %909 = vmatpush1.msra.mxu0 %v908
    %910 = vmatprep.subr.mxu0 0.0
    %v911 = vand.u32 %v118, 4294901760
    %912 = vmatpush1.msra.mxu0 %v911
    %913 = vmatprep.subr.mxu0 0.0
    %v914 = vand.u32 %v119, 4294901760
    %915 = vmatpush1.msra.mxu0 %v914
    %916 = vmatprep.subr.mxu0 0.0
    %v917 = vand.u32 %v120, 4294901760
    %918 = vmatpush1.msra.mxu0 %v917
    %919 = vmatprep.subr.mxu0 0.0
    %v920 = vand.u32 %v121, 4294901760
    %921 = vmatpush1.msra.mxu0 %v920
    %922 = vmatprep.subr.mxu0 0.0
    %v923 = vand.u32 %v122, 4294901760
    %924 = vmatpush1.msra.mxu0 %v923
    %925 = vmatprep.subr.mxu0 0.0
    %v926 = vand.u32 %v123, 4294901760
    %927 = vmatpush1.msra.mxu0 %v926
    %928 = vmatprep.subr.mxu0 0.0
    %v929 = vand.u32 %v124, 4294901760
    %930 = vmatpush1.msra.mxu0 %v929
    %931 = vmatprep.subr.mxu0 0.0
    %v932 = vand.u32 %v125, 4294901760
    %933 = vmatpush1.msra.mxu0 %v932
    %934 = vmatprep.subr.mxu0 0.0
    %v935 = vand.u32 %v126, 4294901760
    %936 = vmatpush1.msra.mxu0 %v935
    %937 = vmatprep.subr.mxu0 0.0
    %v938 = vand.u32 %v127, 4294901760
    %939 = vmatpush1.msra.mxu0 %v938
    %940 = vmatprep.subr.mxu0 0.0
    %v941 = vand.u32 %v128, 4294901760
    %942 = vmatpush1.msra.mxu0 %v941
    %943 = vmatprep.subr.mxu0 0.0
    %v944 = vand.u32 %v129, 4294901760
    %945 = vmatpush1.msra.mxu0 %v944
    %946 = vmatprep.subr.mxu0 0.0
    %v947 = vand.u32 %v130, 4294901760
    %948 = vmatpush1.msra.mxu0 %v947
    %949 = vmatprep.subr.mxu0 0.0
    %v950 = vand.u32 %v131, 4294901760
    %951 = vmatpush1.msra.mxu0 %v950
    %952 = vmatprep.subr.mxu0 0.0
    %v953 = vand.u32 %v132, 4294901760
    %954 = vmatpush1.msra.mxu0 %v953
    %955 = vmatprep.subr.mxu0 0.0
    %v956 = vand.u32 %v133, 4294901760
    %957 = vmatpush1.msra.mxu0 %v956
    %958 = vmatprep.subr.mxu0 0.0
    %v959 = vand.u32 %v134, 4294901760
    %960 = vmatpush1.msra.mxu0 %v959
    %961 = vmatprep.subr.mxu0 0.0
    %v962 = vand.u32 %v135, 4294901760
    %963 = vmatpush1.msra.mxu0 %v962
    %964 = vmatprep.subr.mxu0 0.0
    %v965 = vand.u32 %v136, 4294901760
    %966 = vmatpush1.msra.mxu0 %v965
    %967 = vmatprep.subr.mxu0 0.0
    %v968 = vand.u32 %v137, 4294901760
    %969 = vmatpush1.msra.mxu0 %v968
    %970 = vmatprep.subr.mxu0 0.0
    %v971 = vand.u32 %v138, 4294901760
    %972 = vmatpush1.msra.mxu0 %v971
    %973 = vmatprep.subr.mxu0 0.0
    %v974 = vand.u32 %v139, 4294901760
    %975 = vmatpush1.msra.mxu0 %v974
    %976 = vmatprep.subr.mxu0 0.0
    %v977 = vand.u32 %v140, 4294901760
    %978 = vmatpush1.msra.mxu0 %v977
    %979 = vmatprep.subr.mxu0 0.0
    %v980 = vand.u32 %v141, 4294901760
    %981 = vmatpush1.msra.mxu0 %v980
    %982 = vmatprep.subr.mxu0 0.0
    %v983 = vand.u32 %v142, 4294901760
    %984 = vmatpush1.msra.mxu0 %v983
    %985 = vmatprep.subr.mxu0 0.0
    %v986 = vand.u32 %v143, 4294901760
    %987 = vmatpush1.msra.mxu0 %v986
    %988 = vmatprep.subr.mxu0 0.0
    %v989 = vand.u32 %v144, 4294901760
    %990 = vmatpush1.msra.mxu0 %v989
    %991 = vmatprep.subr.mxu0 0.0
    %v992 = vand.u32 %v145, 4294901760
    %993 = vmatpush1.msra.mxu0 %v992
    %994 = vmatprep.subr.mxu0 0.0
    %v995 = vand.u32 %v146, 4294901760
    %996 = vmatpush1.msra.mxu0 %v995
    %997 = vmatprep.subr.mxu0 0.0
    %v998 = vand.u32 %v147, 4294901760
    %999 = vmatpush1.msra.mxu0 %v998
    %1000 = vmatprep.subr.mxu0 0.0
    %v1001 = vand.u32 %v148, 4294901760
    %1002 = vmatpush1.msra.mxu0 %v1001
    %v1003 = vand.u32 %v116, 4294901760
    %1004 = vmatprep.mubr.f32.mxu0 %v1003
    %v1005 = vand.u32 %v115, 4294901760
    %1006 = vmatmul.mubr.f32.gmra.mrb[0].mxu0 %v1005
    %v1007 = vpop.f32.mrb[0].mxu0
    %v1008 = vadd.f32 %v904, %v1007
    %v1009 = vpop.f32.mrb[0].mxu0
    %1010 = vdwg.mxu0
    %1011 = vst [vmem:[#allocation7] sm:$0xf] %v1008
    // Predicated region
    $region18: #{tpu_custom_call.1} parent=1 // pred_check
      _
    $region19: #{tpu_custom_call.1} parent=1 // pred_check_branch
      %1013 = sbr.rel (0) target = $region21
    $region20: #{tpu_custom_call.1} parent=1 // pred_region
      %s1015 = ssub.s32 64, 64
      %1016 = vsyncadd [#allocation4], %s1015
      %s1018 = sshll.u32 [#allocation7], 4
      %s1019 = int_to_ptr.vmem [resolvable:$true] %s1018
      %1021 = dma.vmem_to_hbm [thread:$0]  %s1019, 64, %s2, [#allocation4]
    $region21: #{tpu_custom_call.1} parent=1 // pred_fallthru
      _
    // Predicated region
    $region22: #{tpu_custom_call.1} parent=1 // pred_check
      _
    $region23: #{tpu_custom_call.1} parent=1 // pred_check_branch
      %1023 = sbr.rel (0) target = $region25
    $region24: #{tpu_custom_call.1} parent=1 // pred_region
      %1024 = dma.done [#allocation4], 64
    $region25: #{tpu_custom_call.1} parent=1 // pred_fallthru
      _
    %1025 = vsyncpa [#allocation3], 1
    %1026 = vsyncpa [#allocation6], 1
    %1027 = vsyncpa [#allocation4], 1

// kernel: tpu_custom_call.1
$region0: #{tpu_custom_call.1}
  #allocation0 [shape = 'u32[]', space=smem, size = 0x4, offset = 0x4, fixed_abs, tag = 'smem constant byte address 0x4 - core index']
  #allocation1 [shape = 'u32[144,128]{1,0:T(1,128)}', space=vmem, size = 0x12000, scoped, tag = 'internal scratch']
  %s0 = inlined_call_operand.hbm [shape: s32[4,4], index: 0, kind: input, shape index: {}]
  %s1 = inlined_call_operand.hbm [shape: f32[256,128], index: 1, kind: input, shape index: {}]
  %s2 = inlined_call_operand.hbm [shape: f32[4,128], index: 2, kind: output, shape index: {}]
  %s3 = sld [smem:[#allocation0]]
  $region26: #{tpu_custom_call.1} parent=0
    _
  %s5 = ssub.s32 1, %s3
  %s6 = scalar_select 0, %s5, %s3
  $region1: #{tpu_custom_call.1} parent=0
    #allocation2 [shape = 'u8[2048]{0}', space=vmem, size = 0x800, scoped, tag = 'input window, operand 0, single buffered']
    #allocation3 [shape = 's32[1]{0}', space=sflag, size = 0x4, scoped, tag = 'scoped memory for tpu_custom_call.1']
    #allocation4 [shape = 's32[1]{0}', space=sflag, size = 0x4, scoped, tag = 'scoped memory for tpu_custom_call.1']
    #allocation5 [shape = 'u8[131072]{0}', space=vmem, size = 0x20000, scoped, tag = 'input window, operand 1, single buffered']
    #allocation6 [shape = 's32[1]{0}', space=sflag, size = 0x4, scoped, tag = 'scoped memory for tpu_custom_call.1']
    #allocation7 [shape = 'u8[2048]{0}', space=vmem, size = 0x800, scoped, tag = 'output window, operand 0, single buffered']
    %7 = vsyncpa [#allocation3], 0
    %8 = vsyncpa [#allocation6], 0
    %9 = vsyncpa [#allocation4], 0
    // Predicated region
    $region2: #{tpu_custom_call.1} parent=1 // pred_check
      _
    $region3: #{tpu_custom_call.1} parent=1 // pred_check_branch
      %11 = sbr.rel (0) target = $region5
    $region4: #{tpu_custom_call.1} parent=1 // pred_region
      %s13 = ssub.s32 64, 64
      %14 = vsyncadd [#allocation3], %s13
      %s16 = sshll.u32 [#allocation2], 4
      %s17 = int_to_ptr.vmem [resolvable:$true] %s16
      %19 = dma.hbm_to_vmem [thread:$0]  %s0, 64, %s17, [#allocation3]
    $region5: #{tpu_custom_call.1} parent=1 // pred_fallthru
      _
    // Predicated region
    $region6: #{tpu_custom_call.1} parent=1 // pred_check
      _
    $region7: #{tpu_custom_call.1} parent=1 // pred_check_branch
      %21 = sbr.rel (0) target = $region9
    $region8: #{tpu_custom_call.1} parent=1 // pred_region
      %s23 = ssub.s32 4096, 4096
      %24 = vsyncadd [#allocation6], %s23
      %s25 = sshll.u32 [#allocation5], 4
      %s26 = int_to_ptr.vmem [resolvable:$true] %s25
      %31 = dma.hbm_to_vmem [thread:$0]  %s1, 4096, %s26, [#allocation6], 128, 128, 8
    $region9: #{tpu_custom_call.1} parent=1 // pred_fallthru
      _
    // Predicated region
    $region10: #{tpu_custom_call.1} parent=1 // pred_check
      _
    $region11: #{tpu_custom_call.1} parent=1 // pred_check_branch
      %33 = sbr.rel (0) target = $region13
    $region12: #{tpu_custom_call.1} parent=1 // pred_region
      %34 = dma.done [#allocation3], 64
    $region13: #{tpu_custom_call.1} parent=1 // pred_fallthru
      _
    // Predicated region
    $region14: #{tpu_custom_call.1} parent=1 // pred_check
      _
    $region15: #{tpu_custom_call.1} parent=1 // pred_check_branch
      %36 = sbr.rel (0) target = $region17
    $region16: #{tpu_custom_call.1} parent=1 // pred_region
      %37 = dma.done [#allocation6], 4096
    $region17: #{tpu_custom_call.1} parent=1 // pred_fallthru
      _
    %v38 = vld [vmem:[#allocation2] sm:$0xf]
    %v39 = vlaneseq
    %v40 = vand.u32 %v39, 127
    %v41 = vadd.s32 %v40, 128
    %vm42 = vcmp.ge.s32.totalorder %v38, 0
    %vm43 = vcmp.lt.s32.totalorder %v38, 64
    %vm44 = vmand %vm42, %vm43
    %45 = vset.pattern.permute.xlu0 0
    %46 = vperm.xlu0 %45, %v38
    %v47 = vpop.permute.xlu0 %46
    %vm48 = vcmp.eq.s32.totalorder %v40, %v47
    %vm49 = vcmp.eq.s32.totalorder %v41, %v47
    %v50 = vsel %vm44, 1, 0
    %51 = vset.pattern.permute.xlu0 0
    %52 = vperm.xlu0 %51, %v50
    %v53 = vpop.permute.xlu0 %52
    %vm54 = vcmp.eq.s32.totalorder %v53, 1
    %vm55 = vmand %vm48, %vm54
    %vm56 = vmand %vm49, %vm54
    %v57 = vsel %vm55, 1, 0
    %v58 = vsel %vm56, 1, 0
    %v59 = vcvt.s32.f32 %v57
    %v60 = vcvt.s32.f32 %v58
    %v61 = vadd.f32 %v59, 0.0
    %v62 = vadd.f32 %v60, 0.0
    %v63 = vadd.s32 %v38, 64
    %64 = vset.pattern.permute.xlu0 1
    %65 = vperm.xlu0 %64, %v63
    %v66 = vpop.permute.xlu0 %65
    %vm67 = vcmp.eq.s32.totalorder %v40, %v66
    %vm68 = vcmp.eq.s32.totalorder %v41, %v66
    %69 = vset.pattern.permute.xlu0 1
    %70 = vperm.xlu0 %69, %v50
    %v71 = vpop.permute.xlu0 %70
    %vm72 = vcmp.eq.s32.totalorder %v71, 1
    %vm73 = vmand %vm67, %vm72
    %vm74 = vmand %vm68, %vm72
    %v75 = vsel %vm73, 1, 0
    %v76 = vsel %vm74, 1, 0
    %v77 = vcvt.s32.f32 %v75
    %v78 = vcvt.s32.f32 %v76
    %v79 = vadd.f32 %v61, %v77
    %v80 = vadd.f32 %v62, %v78
    %v81 = vadd.s32 %v38, 128
    %82 = vset.pattern.permute.xlu0 2
    %83 = vperm.xlu0 %82, %v81
    %v84 = vpop.permute.xlu0 %83
    %vm85 = vcmp.eq.s32.totalorder %v40, %v84
    %vm86 = vcmp.eq.s32.totalorder %v41, %v84
    %87 = vset.pattern.permute.xlu0 2
    %88 = vperm.xlu0 %87, %v50
    %v89 = vpop.permute.xlu0 %88
    %vm90 = vcmp.eq.s32.totalorder %v89, 1
    %vm91 = vmand %vm85, %vm90
    %vm92 = vmand %vm86, %vm90
    %v93 = vsel %vm91, 1, 0
    %v94 = vsel %vm92, 1, 0
    %v95 = vcvt.s32.f32 %v93
    %v96 = vcvt.s32.f32 %v94
    %v97 = vadd.f32 %v79, %v95
    %v98 = vadd.f32 %v80, %v96
    %v99 = vadd.s32 %v38, 192
    %100 = vset.pattern.permute.xlu0 3
    %101 = vperm.xlu0 %100, %v99
    %v102 = vpop.permute.xlu0 %101
    %vm103 = vcmp.eq.s32.totalorder %v40, %v102
    %vm104 = vcmp.eq.s32.totalorder %v41, %v102
    %105 = vset.pattern.permute.xlu0 3
    %106 = vperm.xlu0 %105, %v50
    %v107 = vpop.permute.xlu0 %106
    %vm108 = vcmp.eq.s32.totalorder %v107, 1
    %vm109 = vmand %vm103, %vm108
    %vm110 = vmand %vm104, %vm108
    %v111 = vsel %vm109, 1, 0
    %v112 = vsel %vm110, 1, 0
    %v113 = vcvt.s32.f32 %v111
    %v114 = vcvt.s32.f32 %v112
    %v115 = vadd.f32 %v97, %v113
    %v116 = vadd.f32 %v98, %v114
    %v117 = vld [vmem:[#allocation5] sm:$0xff]
    %v118 = vld [vmem:[#allocation5 + $0x8] sm:$0xff]
    %v119 = vld [vmem:[#allocation5 + $0x10] sm:$0xff]
    %v120 = vld [vmem:[#allocation5 + $0x18] sm:$0xff]
    %v121 = vld [vmem:[#allocation5 + $0x20] sm:$0xff]
    %v122 = vld [vmem:[#allocation5 + $0x28] sm:$0xff]
    %v123 = vld [vmem:[#allocation5 + $0x30] sm:$0xff]
    %v124 = vld [vmem:[#allocation5 + $0x38] sm:$0xff]
    %v125 = vld [vmem:[#allocation5 + $0x40] sm:$0xff]
    %v126 = vld [vmem:[#allocation5 + $0x48] sm:$0xff]
    %v127 = vld [vmem:[#allocation5 + $0x50] sm:$0xff]
    %v128 = vld [vmem:[#allocation5 + $0x58] sm:$0xff]
    %v129 = vld [vmem:[#allocation5 + $0x60] sm:$0xff]
    %v130 = vld [vmem:[#allocation5 + $0x68] sm:$0xff]
    %v131 = vld [vmem:[#allocation5 + $0x70] sm:$0xff]
    %v132 = vld [vmem:[#allocation5 + $0x78] sm:$0xff]
    %v133 = vld [vmem:[#allocation5 + $0x80] sm:$0xff]
    %v134 = vld [vmem:[#allocation5 + $0x88] sm:$0xff]
    %v135 = vld [vmem:[#allocation5 + $0x90] sm:$0xff]
    %v136 = vld [vmem:[#allocation5 + $0x98] sm:$0xff]
    %v137 = vld [vmem:[#allocation5 + $0xa0] sm:$0xff]
    %v138 = vld [vmem:[#allocation5 + $0xa8] sm:$0xff]
    %v139 = vld [vmem:[#allocation5 + $0xb0] sm:$0xff]
    %v140 = vld [vmem:[#allocation5 + $0xb8] sm:$0xff]
    %v141 = vld [vmem:[#allocation5 + $0xc0] sm:$0xff]
    %v142 = vld [vmem:[#allocation5 + $0xc8] sm:$0xff]
    %v143 = vld [vmem:[#allocation5 + $0xd0] sm:$0xff]
    %v144 = vld [vmem:[#allocation5 + $0xd8] sm:$0xff]
    %v145 = vld [vmem:[#allocation5 + $0xe0] sm:$0xff]
    %v146 = vld [vmem:[#allocation5 + $0xe8] sm:$0xff]
    %v147 = vld [vmem:[#allocation5 + $0xf0] sm:$0xff]
    %v148 = vld [vmem:[#allocation5 + $0xf8] sm:$0xff]
    %149 = vmatprep.subr.mxu0 0.0
    %v150 = vand.u32 %v117, 4294901760
    %151 = vmatpush1.msra.mxu0 %v150
    %152 = vmatprep.subr.mxu0 0.0
    %v153 = vand.u32 %v118, 4294901760
    %154 = vmatpush1.msra.mxu0 %v153
    %155 = vmatprep.subr.mxu0 0.0
    %v156 = vand.u32 %v119, 4294901760
    %157 = vmatpush1.msra.mxu0 %v156
    %158 = vmatprep.subr.mxu0 0.0
    %v159 = vand.u32 %v120, 4294901760
    %160 = vmatpush1.msra.mxu0 %v159
    %161 = vmatprep.subr.mxu0 0.0
    %v162 = vand.u32 %v121, 4294901760
    %163 = vmatpush1.msra.mxu0 %v162
    %164 = vmatprep.subr.mxu0 0.0
    %v165 = vand.u32 %v122, 4294901760
    %166 = vmatpush1.msra.mxu0 %v165
    %167 = vmatprep.subr.mxu0 0.0
    %v168 = vand.u32 %v123, 4294901760
    %169 = vmatpush1.msra.mxu0 %v168
    %170 = vmatprep.subr.mxu0 0.0
    %v171 = vand.u32 %v124, 4294901760
    %172 = vmatpush1.msra.mxu0 %v171
    %173 = vmatprep.subr.mxu0 0.0
    %v174 = vand.u32 %v125, 4294901760
    %175 = vmatpush1.msra.mxu0 %v174
    %176 = vmatprep.subr.mxu0 0.0
    %v177 = vand.u32 %v126, 4294901760
    %178 = vmatpush1.msra.mxu0 %v177
    %179 = vmatprep.subr.mxu0 0.0
    %v180 = vand.u32 %v127, 4294901760
    %181 = vmatpush1.msra.mxu0 %v180
    %182 = vmatprep.subr.mxu0 0.0
    %v183 = vand.u32 %v128, 4294901760
    %184 = vmatpush1.msra.mxu0 %v183
    %185 = vmatprep.subr.mxu0 0.0
    %v186 = vand.u32 %v129, 4294901760
    %187 = vmatpush1.msra.mxu0 %v186
    %188 = vmatprep.subr.mxu0 0.0
    %v189 = vand.u32 %v130, 4294901760
    %190 = vmatpush1.msra.mxu0 %v189
    %191 = vmatprep.subr.mxu0 0.0
    %v192 = vand.u32 %v131, 4294901760
    %193 = vmatpush1.msra.mxu0 %v192
    %194 = vmatprep.subr.mxu0 0.0
    %v195 = vand.u32 %v132, 4294901760
    %196 = vmatpush1.msra.mxu0 %v195
    %197 = vmatprep.subr.mxu0 0.0
    %v198 = vand.u32 %v133, 4294901760
    %199 = vmatpush1.msra.mxu0 %v198
    %200 = vmatprep.subr.mxu0 0.0
    %v201 = vand.u32 %v134, 4294901760
    %202 = vmatpush1.msra.mxu0 %v201
    %203 = vmatprep.subr.mxu0 0.0
    %v204 = vand.u32 %v135, 4294901760
    %205 = vmatpush1.msra.mxu0 %v204
    %206 = vmatprep.subr.mxu0 0.0
    %v207 = vand.u32 %v136, 4294901760
    %208 = vmatpush1.msra.mxu0 %v207
    %209 = vmatprep.subr.mxu0 0.0
    %v210 = vand.u32 %v137, 4294901760
    %211 = vmatpush1.msra.mxu0 %v210
    %212 = vmatprep.subr.mxu0 0.0
    %v213 = vand.u32 %v138, 4294901760
    %214 = vmatpush1.msra.mxu0 %v213
    %215 = vmatprep.subr.mxu0 0.0
    %v216 = vand.u32 %v139, 4294901760
    %217 = vmatpush1.msra.mxu0 %v216
    %218 = vmatprep.subr.mxu0 0.0
    %v219 = vand.u32 %v140, 4294901760
    %220 = vmatpush1.msra.mxu0 %v219
    %221 = vmatprep.subr.mxu0 0.0
    %v222 = vand.u32 %v141, 4294901760
    %223 = vmatpush1.msra.mxu0 %v222
    %224 = vmatprep.subr.mxu0 0.0
    %v225 = vand.u32 %v142, 4294901760
    %226 = vmatpush1.msra.mxu0 %v225
    %227 = vmatprep.subr.mxu0 0.0
    %v228 = vand.u32 %v143, 4294901760
    %229 = vmatpush1.msra.mxu0 %v228
    %230 = vmatprep.subr.mxu0 0.0
    %v231 = vand.u32 %v144, 4294901760
    %232 = vmatpush1.msra.mxu0 %v231
    %233 = vmatprep.subr.mxu0 0.0
    %v234 = vand.u32 %v145, 4294901760
    %235 = vmatpush1.msra.mxu0 %v234
    %236 = vmatprep.subr.mxu0 0.0
    %v237 = vand.u32 %v146, 4294901760
    %238 = vmatpush1.msra.mxu0 %v237
    %239 = vmatprep.subr.mxu0 0.0
    %v240 = vand.u32 %v147, 4294901760
    %241 = vmatpush1.msra.mxu0 %v240
    %242 = vmatprep.subr.mxu0 0.0
    %v243 = vand.u32 %v148, 4294901760
    %244 = vmatpush1.msra.mxu0 %v243
    %v245 = vand.u32 %v116, 4294901760
    %v246 = vsub.f32 %v116, %v245
    %v247 = vand.u32 %v246, 4294901760
    %v248 = vsub.f32 %v246, %v247
    %v249 = vand.u32 %v248, 4294901760
    %250 = vmatprep.mubr.f32.mxu0 %v249
    %v251 = vand.u32 %v115, 4294901760
    %v252 = vsub.f32 %v115, %v251
    %v253 = vand.u32 %v252, 4294901760
    %v254 = vsub.f32 %v252, %v253
    %v255 = vand.u32 %v254, 4294901760
    %256 = vmatmul.mubr.f32.gmra.mrb[0].mxu0 %v255
    %v257 = vpop.f32.mrb[0].mxu0
    %v258 = vadd.f32 0.0, %v257
    %v259 = vpop.f32.mrb[0].mxu0
    %260 = vdwg.mxu0
    %261 = vmatprep.subr.mxu0 0.0
    %v262 = vand.u32 %v117, 4294901760
    %v263 = vsub.f32 %v117, %v262
    %v264 = vand.u32 %v263, 4294901760
    %v265 = vsub.f32 %v263, %v264
    %v266 = vand.u32 %v265, 4294901760
    %267 = vmatpush1.msra.mxu0 %v266
    %268 = vmatprep.subr.mxu0 0.0
    %v269 = vand.u32 %v118, 4294901760
    %v270 = vsub.f32 %v118, %v269
    %v271 = vand.u32 %v270, 4294901760
    %v272 = vsub.f32 %v270, %v271
    %v273 = vand.u32 %v272, 4294901760
    %274 = vmatpush1.msra.mxu0 %v273
    %275 = vmatprep.subr.mxu0 0.0
    %v276 = vand.u32 %v119, 4294901760
    %v277 = vsub.f32 %v119, %v276
    %v278 = vand.u32 %v277, 4294901760
    %v279 = vsub.f32 %v277, %v278
    %v280 = vand.u32 %v279, 4294901760
    %281 = vmatpush1.msra.mxu0 %v280
    %282 = vmatprep.subr.mxu0 0.0
    %v283 = vand.u32 %v120, 4294901760
    %v284 = vsub.f32 %v120, %v283
    %v285 = vand.u32 %v284, 4294901760
    %v286 = vsub.f32 %v284, %v285
    %v287 = vand.u32 %v286, 4294901760
    %288 = vmatpush1.msra.mxu0 %v287
    %289 = vmatprep.subr.mxu0 0.0
    %v290 = vand.u32 %v121, 4294901760
    %v291 = vsub.f32 %v121, %v290
    %v292 = vand.u32 %v291, 4294901760
    %v293 = vsub.f32 %v291, %v292
    %v294 = vand.u32 %v293, 4294901760
    %295 = vmatpush1.msra.mxu0 %v294
    %296 = vmatprep.subr.mxu0 0.0
    %v297 = vand.u32 %v122, 4294901760
    %v298 = vsub.f32 %v122, %v297
    %v299 = vand.u32 %v298, 4294901760
    %v300 = vsub.f32 %v298, %v299
    %v301 = vand.u32 %v300, 4294901760
    %302 = vmatpush1.msra.mxu0 %v301
    %303 = vmatprep.subr.mxu0 0.0
    %v304 = vand.u32 %v123, 4294901760
    %v305 = vsub.f32 %v123, %v304
    %v306 = vand.u32 %v305, 4294901760
    %v307 = vsub.f32 %v305, %v306
    %v308 = vand.u32 %v307, 4294901760
    %309 = vmatpush1.msra.mxu0 %v308
    %310 = vmatprep.subr.mxu0 0.0
    %v311 = vand.u32 %v124, 4294901760
    %v312 = vsub.f32 %v124, %v311
    %v313 = vand.u32 %v312, 4294901760
    %v314 = vsub.f32 %v312, %v313
    %v315 = vand.u32 %v314, 4294901760
    %316 = vmatpush1.msra.mxu0 %v315
    %317 = vmatprep.subr.mxu0 0.0
    %v318 = vand.u32 %v125, 4294901760
    %v319 = vsub.f32 %v125, %v318
    %v320 = vand.u32 %v319, 4294901760
    %v321 = vsub.f32 %v319, %v320
    %v322 = vand.u32 %v321, 4294901760
    %323 = vmatpush1.msra.mxu0 %v322
    %324 = vmatprep.subr.mxu0 0.0
    %v325 = vand.u32 %v126, 4294901760
    %v326 = vsub.f32 %v126, %v325
    %v327 = vand.u32 %v326, 4294901760
    %v328 = vsub.f32 %v326, %v327
    %v329 = vand.u32 %v328, 4294901760
    %330 = vmatpush1.msra.mxu0 %v329
    %331 = vmatprep.subr.mxu0 0.0
    %v332 = vand.u32 %v127, 4294901760
    %v333 = vsub.f32 %v127, %v332
    %v334 = vand.u32 %v333, 4294901760
    %v335 = vsub.f32 %v333, %v334
    %v336 = vand.u32 %v335, 4294901760
    %337 = vmatpush1.msra.mxu0 %v336
    %338 = vmatprep.subr.mxu0 0.0
    %v339 = vand.u32 %v128, 4294901760
    %v340 = vsub.f32 %v128, %v339
    %v341 = vand.u32 %v340, 4294901760
    %v342 = vsub.f32 %v340, %v341
    %v343 = vand.u32 %v342, 4294901760
    %344 = vmatpush1.msra.mxu0 %v343
    %345 = vmatprep.subr.mxu0 0.0
    %v346 = vand.u32 %v129, 4294901760
    %v347 = vsub.f32 %v129, %v346
    %v348 = vand.u32 %v347, 4294901760
    %v349 = vsub.f32 %v347, %v348
    %v350 = vand.u32 %v349, 4294901760
    %351 = vmatpush1.msra.mxu0 %v350
    %352 = vmatprep.subr.mxu0 0.0
    %v353 = vand.u32 %v130, 4294901760
    %v354 = vsub.f32 %v130, %v353
    %v355 = vand.u32 %v354, 4294901760
    %v356 = vsub.f32 %v354, %v355
    %v357 = vand.u32 %v356, 4294901760
    %358 = vmatpush1.msra.mxu0 %v357
    %359 = vmatprep.subr.mxu0 0.0
    %v360 = vand.u32 %v131, 4294901760
    %v361 = vsub.f32 %v131, %v360
    %v362 = vand.u32 %v361, 4294901760
    %v363 = vsub.f32 %v361, %v362
    %v364 = vand.u32 %v363, 4294901760
    %365 = vmatpush1.msra.mxu0 %v364
    %366 = vmatprep.subr.mxu0 0.0
    %v367 = vand.u32 %v132, 4294901760
    %v368 = vsub.f32 %v132, %v367
    %v369 = vand.u32 %v368, 4294901760
    %v370 = vsub.f32 %v368, %v369
    %v371 = vand.u32 %v370, 4294901760
    %372 = vmatpush1.msra.mxu0 %v371
    %373 = vmatprep.subr.mxu0 0.0
    %v374 = vand.u32 %v133, 4294901760
    %v375 = vsub.f32 %v133, %v374
    %v376 = vand.u32 %v375, 4294901760
    %v377 = vsub.f32 %v375, %v376
    %v378 = vand.u32 %v377, 4294901760
    %379 = vmatpush1.msra.mxu0 %v378
    %380 = vmatprep.subr.mxu0 0.0
    %v381 = vand.u32 %v134, 4294901760
    %v382 = vsub.f32 %v134, %v381
    %v383 = vand.u32 %v382, 4294901760
    %v384 = vsub.f32 %v382, %v383
    %v385 = vand.u32 %v384, 4294901760
    %386 = vmatpush1.msra.mxu0 %v385
    %387 = vmatprep.subr.mxu0 0.0
    %v388 = vand.u32 %v135, 4294901760
    %v389 = vsub.f32 %v135, %v388
    %v390 = vand.u32 %v389, 4294901760
    %v391 = vsub.f32 %v389, %v390
    %v392 = vand.u32 %v391, 4294901760
    %393 = vmatpush1.msra.mxu0 %v392
    %394 = vmatprep.subr.mxu0 0.0
    %v395 = vand.u32 %v136, 4294901760
    %v396 = vsub.f32 %v136, %v395
    %v397 = vand.u32 %v396, 4294901760
    %v398 = vsub.f32 %v396, %v397
    %v399 = vand.u32 %v398, 4294901760
    %400 = vmatpush1.msra.mxu0 %v399
    %401 = vmatprep.subr.mxu0 0.0
    %v402 = vand.u32 %v137, 4294901760
    %v403 = vsub.f32 %v137, %v402
    %v404 = vand.u32 %v403, 4294901760
    %v405 = vsub.f32 %v403, %v404
    %v406 = vand.u32 %v405, 4294901760
    %407 = vmatpush1.msra.mxu0 %v406
    %408 = vmatprep.subr.mxu0 0.0
    %v409 = vand.u32 %v138, 4294901760
    %v410 = vsub.f32 %v138, %v409
    %v411 = vand.u32 %v410, 4294901760
    %v412 = vsub.f32 %v410, %v411
    %v413 = vand.u32 %v412, 4294901760
    %414 = vmatpush1.msra.mxu0 %v413
    %415 = vmatprep.subr.mxu0 0.0
    %v416 = vand.u32 %v139, 4294901760
    %v417 = vsub.f32 %v139, %v416
    %v418 = vand.u32 %v417, 4294901760
    %v419 = vsub.f32 %v417, %v418
    %v420 = vand.u32 %v419, 4294901760
    %421 = vmatpush1.msra.mxu0 %v420
    %422 = vmatprep.subr.mxu0 0.0
    %v423 = vand.u32 %v140, 4294901760
    %v424 = vsub.f32 %v140, %v423
    %v425 = vand.u32 %v424, 4294901760
    %v426 = vsub.f32 %v424, %v425
    %v427 = vand.u32 %v426, 4294901760
    %428 = vmatpush1.msra.mxu0 %v427
    %429 = vmatprep.subr.mxu0 0.0
    %v430 = vand.u32 %v141, 4294901760
    %v431 = vsub.f32 %v141, %v430
    %v432 = vand.u32 %v431, 4294901760
    %v433 = vsub.f32 %v431, %v432
    %v434 = vand.u32 %v433, 4294901760
    %435 = vmatpush1.msra.mxu0 %v434
    %436 = vmatprep.subr.mxu0 0.0
    %v437 = vand.u32 %v142, 4294901760
    %v438 = vsub.f32 %v142, %v437
    %v439 = vand.u32 %v438, 4294901760
    %v440 = vsub.f32 %v438, %v439
    %v441 = vand.u32 %v440, 4294901760
    %442 = vmatpush1.msra.mxu0 %v441
    %443 = vmatprep.subr.mxu0 0.0
    %v444 = vand.u32 %v143, 4294901760
    %v445 = vsub.f32 %v143, %v444
    %v446 = vand.u32 %v445, 4294901760
    %v447 = vsub.f32 %v445, %v446
    %v448 = vand.u32 %v447, 4294901760
    %449 = vmatpush1.msra.mxu0 %v448
    %450 = vmatprep.subr.mxu0 0.0
    %v451 = vand.u32 %v144, 4294901760
    %v452 = vsub.f32 %v144, %v451
    %v453 = vand.u32 %v452, 4294901760
    %v454 = vsub.f32 %v452, %v453
    %v455 = vand.u32 %v454, 4294901760
    %456 = vmatpush1.msra.mxu0 %v455
    %457 = vmatprep.subr.mxu0 0.0
    %v458 = vand.u32 %v145, 4294901760
    %v459 = vsub.f32 %v145, %v458
    %v460 = vand.u32 %v459, 4294901760
    %v461 = vsub.f32 %v459, %v460
    %v462 = vand.u32 %v461, 4294901760
    %463 = vmatpush1.msra.mxu0 %v462
    %464 = vmatprep.subr.mxu0 0.0
    %v465 = vand.u32 %v146, 4294901760
    %v466 = vsub.f32 %v146, %v465
    %v467 = vand.u32 %v466, 4294901760
    %v468 = vsub.f32 %v466, %v467
    %v469 = vand.u32 %v468, 4294901760
    %470 = vmatpush1.msra.mxu0 %v469
    %471 = vmatprep.subr.mxu0 0.0
    %v472 = vand.u32 %v147, 4294901760
    %v473 = vsub.f32 %v147, %v472
    %v474 = vand.u32 %v473, 4294901760
    %v475 = vsub.f32 %v473, %v474
    %v476 = vand.u32 %v475, 4294901760
    %477 = vmatpush1.msra.mxu0 %v476
    %478 = vmatprep.subr.mxu0 0.0
    %v479 = vand.u32 %v148, 4294901760
    %v480 = vsub.f32 %v148, %v479
    %v481 = vand.u32 %v480, 4294901760
    %v482 = vsub.f32 %v480, %v481
    %v483 = vand.u32 %v482, 4294901760
    %484 = vmatpush1.msra.mxu0 %v483
    %v485 = vand.u32 %v116, 4294901760
    %486 = vmatprep.mubr.f32.mxu0 %v485
    %v487 = vand.u32 %v115, 4294901760
    %488 = vmatmul.mubr.f32.gmra.mrb[0].mxu0 %v487
    %v489 = vpop.f32.mrb[0].mxu0
    %v490 = vadd.f32 %v258, %v489
    %v491 = vpop.f32.mrb[0].mxu0
    %492 = vdwg.mxu0
    %493 = vmatprep.subr.mxu0 0.0
    %v494 = vand.u32 %v117, 4294901760
    %v495 = vsub.f32 %v117, %v494
    %496 = vmatpush1.msra.mxu0 %v495
    %497 = vmatprep.subr.mxu0 0.0
    %v498 = vand.u32 %v118, 4294901760
    %v499 = vsub.f32 %v118, %v498
    %500 = vmatpush1.msra.mxu0 %v499
    %501 = vmatprep.subr.mxu0 0.0
    %v502 = vand.u32 %v119, 4294901760
    %v503 = vsub.f32 %v119, %v502
    %504 = vmatpush1.msra.mxu0 %v503
    %505 = vmatprep.subr.mxu0 0.0
    %v506 = vand.u32 %v120, 4294901760
    %v507 = vsub.f32 %v120, %v506
    %508 = vmatpush1.msra.mxu0 %v507
    %509 = vmatprep.subr.mxu0 0.0
    %v510 = vand.u32 %v121, 4294901760
    %v511 = vsub.f32 %v121, %v510
    %512 = vmatpush1.msra.mxu0 %v511
    %513 = vmatprep.subr.mxu0 0.0
    %v514 = vand.u32 %v122, 4294901760
    %v515 = vsub.f32 %v122, %v514
    %516 = vmatpush1.msra.mxu0 %v515
    %517 = vmatprep.subr.mxu0 0.0
    %v518 = vand.u32 %v123, 4294901760
    %v519 = vsub.f32 %v123, %v518
    %520 = vmatpush1.msra.mxu0 %v519
    %521 = vmatprep.subr.mxu0 0.0
    %v522 = vand.u32 %v124, 4294901760
    %v523 = vsub.f32 %v124, %v522
    %524 = vmatpush1.msra.mxu0 %v523
    %525 = vmatprep.subr.mxu0 0.0
    %v526 = vand.u32 %v125, 4294901760
    %v527 = vsub.f32 %v125, %v526
    %528 = vmatpush1.msra.mxu0 %v527
    %529 = vmatprep.subr.mxu0 0.0
    %v530 = vand.u32 %v126, 4294901760
    %v531 = vsub.f32 %v126, %v530
    %532 = vmatpush1.msra.mxu0 %v531
    %533 = vmatprep.subr.mxu0 0.0
    %v534 = vand.u32 %v127, 4294901760
    %v535 = vsub.f32 %v127, %v534
    %536 = vmatpush1.msra.mxu0 %v535
    %537 = vmatprep.subr.mxu0 0.0
    %v538 = vand.u32 %v128, 4294901760
    %v539 = vsub.f32 %v128, %v538
    %540 = vmatpush1.msra.mxu0 %v539
    %541 = vmatprep.subr.mxu0 0.0
    %v542 = vand.u32 %v129, 4294901760
    %v543 = vsub.f32 %v129, %v542
    %544 = vmatpush1.msra.mxu0 %v543
    %545 = vmatprep.subr.mxu0 0.0
    %v546 = vand.u32 %v130, 4294901760
    %v547 = vsub.f32 %v130, %v546
    %548 = vmatpush1.msra.mxu0 %v547
    %549 = vmatprep.subr.mxu0 0.0
    %v550 = vand.u32 %v131, 4294901760
    %v551 = vsub.f32 %v131, %v550
    %552 = vmatpush1.msra.mxu0 %v551
    %553 = vmatprep.subr.mxu0 0.0
    %v554 = vand.u32 %v132, 4294901760
    %v555 = vsub.f32 %v132, %v554
    %556 = vmatpush1.msra.mxu0 %v555
    %557 = vmatprep.subr.mxu0 0.0
    %v558 = vand.u32 %v133, 4294901760
    %v559 = vsub.f32 %v133, %v558
    %560 = vmatpush1.msra.mxu0 %v559
    %561 = vmatprep.subr.mxu0 0.0
    %v562 = vand.u32 %v134, 4294901760
    %v563 = vsub.f32 %v134, %v562
    %564 = vmatpush1.msra.mxu0 %v563
    %565 = vmatprep.subr.mxu0 0.0
    %v566 = vand.u32 %v135, 4294901760
    %v567 = vsub.f32 %v135, %v566
    %568 = vmatpush1.msra.mxu0 %v567
    %569 = vmatprep.subr.mxu0 0.0
    %v570 = vand.u32 %v136, 4294901760
    %v571 = vsub.f32 %v136, %v570
    %572 = vmatpush1.msra.mxu0 %v571
    %573 = vmatprep.subr.mxu0 0.0
    %v574 = vand.u32 %v137, 4294901760
    %v575 = vsub.f32 %v137, %v574
    %576 = vmatpush1.msra.mxu0 %v575
    %577 = vmatprep.subr.mxu0 0.0
    %v578 = vand.u32 %v138, 4294901760
    %v579 = vsub.f32 %v138, %v578
    %580 = vmatpush1.msra.mxu0 %v579
    %581 = vmatprep.subr.mxu0 0.0
    %v582 = vand.u32 %v139, 4294901760
    %v583 = vsub.f32 %v139, %v582
    %584 = vmatpush1.msra.mxu0 %v583
    %585 = vmatprep.subr.mxu0 0.0
    %v586 = vand.u32 %v140, 4294901760
    %v587 = vsub.f32 %v140, %v586
    %588 = vmatpush1.msra.mxu0 %v587
    %589 = vmatprep.subr.mxu0 0.0
    %v590 = vand.u32 %v141, 4294901760
    %v591 = vsub.f32 %v141, %v590
    %592 = vmatpush1.msra.mxu0 %v591
    %593 = vmatprep.subr.mxu0 0.0
    %v594 = vand.u32 %v142, 4294901760
    %v595 = vsub.f32 %v142, %v594
    %596 = vmatpush1.msra.mxu0 %v595
    %597 = vmatprep.subr.mxu0 0.0
    %v598 = vand.u32 %v143, 4294901760
    %v599 = vsub.f32 %v143, %v598
    %600 = vmatpush1.msra.mxu0 %v599
    %601 = vmatprep.subr.mxu0 0.0
    %v602 = vand.u32 %v144, 4294901760
    %v603 = vsub.f32 %v144, %v602
    %604 = vmatpush1.msra.mxu0 %v603
    %605 = vmatprep.subr.mxu0 0.0
    %v606 = vand.u32 %v145, 4294901760
    %v607 = vsub.f32 %v145, %v606
    %608 = vmatpush1.msra.mxu0 %v607
    %609 = vmatprep.subr.mxu0 0.0
    %v610 = vand.u32 %v146, 4294901760
    %v611 = vsub.f32 %v146, %v610
    %612 = vmatpush1.msra.mxu0 %v611
    %613 = vmatprep.subr.mxu0 0.0
    %v614 = vand.u32 %v147, 4294901760
    %v615 = vsub.f32 %v147, %v614
    %616 = vmatpush1.msra.mxu0 %v615
    %617 = vmatprep.subr.mxu0 0.0
    %v618 = vand.u32 %v148, 4294901760
    %v619 = vsub.f32 %v148, %v618
    %620 = vmatpush1.msra.mxu0 %v619
    %v621 = vand.u32 %v116, 4294901760
    %v622 = vsub.f32 %v116, %v621
    %623 = vmatprep.mubr.f32.mxu0 %v622
    %v624 = vand.u32 %v115, 4294901760
    %v625 = vsub.f32 %v115, %v624
    %626 = vmatmul.mubr.f32.gmra.mrb[0].mxu0 %v625
    %v627 = vpop.f32.mrb[0].mxu0
    %v628 = vadd.f32 %v490, %v627
    %v629 = vpop.f32.mrb[0].mxu0
    %630 = vdwg.mxu0
    %631 = vmatprep.subr.mxu0 0.0
    %v632 = vand.u32 %v117, 4294901760
    %633 = vmatpush1.msra.mxu0 %v632
    %634 = vmatprep.subr.mxu0 0.0
    %v635 = vand.u32 %v118, 4294901760
    %636 = vmatpush1.msra.mxu0 %v635
    %637 = vmatprep.subr.mxu0 0.0
    %v638 = vand.u32 %v119, 4294901760
    %639 = vmatpush1.msra.mxu0 %v638
    %640 = vmatprep.subr.mxu0 0.0
    %v641 = vand.u32 %v120, 4294901760
    %642 = vmatpush1.msra.mxu0 %v641
    %643 = vmatprep.subr.mxu0 0.0
    %v644 = vand.u32 %v121, 4294901760
    %645 = vmatpush1.msra.mxu0 %v644
    %646 = vmatprep.subr.mxu0 0.0
    %v647 = vand.u32 %v122, 4294901760
    %648 = vmatpush1.msra.mxu0 %v647
    %649 = vmatprep.subr.mxu0 0.0
    %v650 = vand.u32 %v123, 4294901760
    %651 = vmatpush1.msra.mxu0 %v650
    %652 = vmatprep.subr.mxu0 0.0
    %v653 = vand.u32 %v124, 4294901760
    %654 = vmatpush1.msra.mxu0 %v653
    %655 = vmatprep.subr.mxu0 0.0
    %v656 = vand.u32 %v125, 4294901760
    %657 = vmatpush1.msra.mxu0 %v656
    %658 = vmatprep.subr.mxu0 0.0
    %v659 = vand.u32 %v126, 4294901760
    %660 = vmatpush1.msra.mxu0 %v659
    %661 = vmatprep.subr.mxu0 0.0
    %v662 = vand.u32 %v127, 4294901760
    %663 = vmatpush1.msra.mxu0 %v662
    %664 = vmatprep.subr.mxu0 0.0
    %v665 = vand.u32 %v128, 4294901760
    %666 = vmatpush1.msra.mxu0 %v665
    %667 = vmatprep.subr.mxu0 0.0
    %v668 = vand.u32 %v129, 4294901760
    %669 = vmatpush1.msra.mxu0 %v668
    %670 = vmatprep.subr.mxu0 0.0
    %v671 = vand.u32 %v130, 4294901760
    %672 = vmatpush1.msra.mxu0 %v671
    %673 = vmatprep.subr.mxu0 0.0
    %v674 = vand.u32 %v131, 4294901760
    %675 = vmatpush1.msra.mxu0 %v674
    %676 = vmatprep.subr.mxu0 0.0
    %v677 = vand.u32 %v132, 4294901760
    %678 = vmatpush1.msra.mxu0 %v677
    %679 = vmatprep.subr.mxu0 0.0
    %v680 = vand.u32 %v133, 4294901760
    %681 = vmatpush1.msra.mxu0 %v680
    %682 = vmatprep.subr.mxu0 0.0
    %v683 = vand.u32 %v134, 4294901760
    %684 = vmatpush1.msra.mxu0 %v683
    %685 = vmatprep.subr.mxu0 0.0
    %v686 = vand.u32 %v135, 4294901760
    %687 = vmatpush1.msra.mxu0 %v686
    %688 = vmatprep.subr.mxu0 0.0
    %v689 = vand.u32 %v136, 4294901760
    %690 = vmatpush1.msra.mxu0 %v689
    %691 = vmatprep.subr.mxu0 0.0
    %v692 = vand.u32 %v137, 4294901760
    %693 = vmatpush1.msra.mxu0 %v692
    %694 = vmatprep.subr.mxu0 0.0
    %v695 = vand.u32 %v138, 4294901760
    %696 = vmatpush1.msra.mxu0 %v695
    %697 = vmatprep.subr.mxu0 0.0
    %v698 = vand.u32 %v139, 4294901760
    %699 = vmatpush1.msra.mxu0 %v698
    %700 = vmatprep.subr.mxu0 0.0
    %v701 = vand.u32 %v140, 4294901760
    %702 = vmatpush1.msra.mxu0 %v701
    %703 = vmatprep.subr.mxu0 0.0
    %v704 = vand.u32 %v141, 4294901760
    %705 = vmatpush1.msra.mxu0 %v704
    %706 = vmatprep.subr.mxu0 0.0
    %v707 = vand.u32 %v142, 4294901760
    %708 = vmatpush1.msra.mxu0 %v707
    %709 = vmatprep.subr.mxu0 0.0
    %v710 = vand.u32 %v143, 4294901760
    %711 = vmatpush1.msra.mxu0 %v710
    %712 = vmatprep.subr.mxu0 0.0
    %v713 = vand.u32 %v144, 4294901760
    %714 = vmatpush1.msra.mxu0 %v713
    %715 = vmatprep.subr.mxu0 0.0
    %v716 = vand.u32 %v145, 4294901760
    %717 = vmatpush1.msra.mxu0 %v716
    %718 = vmatprep.subr.mxu0 0.0
    %v719 = vand.u32 %v146, 4294901760
    %720 = vmatpush1.msra.mxu0 %v719
    %721 = vmatprep.subr.mxu0 0.0
    %v722 = vand.u32 %v147, 4294901760
    %723 = vmatpush1.msra.mxu0 %v722
    %724 = vmatprep.subr.mxu0 0.0
    %v725 = vand.u32 %v148, 4294901760
    %726 = vmatpush1.msra.mxu0 %v725
    %v727 = vand.u32 %v116, 4294901760
    %v728 = vsub.f32 %v116, %v727
    %v729 = vand.u32 %v728, 4294901760
    %730 = vmatprep.mubr.f32.mxu0 %v729
    %v731 = vand.u32 %v115, 4294901760
    %v732 = vsub.f32 %v115, %v731
    %v733 = vand.u32 %v732, 4294901760
    %734 = vmatmul.mubr.f32.gmra.mrb[0].mxu0 %v733
    %v735 = vpop.f32.mrb[0].mxu0
    %v736 = vadd.f32 %v628, %v735
    %v737 = vpop.f32.mrb[0].mxu0
    %738 = vdwg.mxu0
    %739 = vmatprep.subr.mxu0 0.0
    %v740 = vand.u32 %v117, 4294901760
    %v741 = vsub.f32 %v117, %v740
    %v742 = vand.u32 %v741, 4294901760
    %743 = vmatpush1.msra.mxu0 %v742
    %744 = vmatprep.subr.mxu0 0.0
    %v745 = vand.u32 %v118, 4294901760
    %v746 = vsub.f32 %v118, %v745
    %v747 = vand.u32 %v746, 4294901760
    %748 = vmatpush1.msra.mxu0 %v747
    %749 = vmatprep.subr.mxu0 0.0
    %v750 = vand.u32 %v119, 4294901760
    %v751 = vsub.f32 %v119, %v750
    %v752 = vand.u32 %v751, 4294901760
    %753 = vmatpush1.msra.mxu0 %v752
    %754 = vmatprep.subr.mxu0 0.0
    %v755 = vand.u32 %v120, 4294901760
    %v756 = vsub.f32 %v120, %v755
    %v757 = vand.u32 %v756, 4294901760
    %758 = vmatpush1.msra.mxu0 %v757
    %759 = vmatprep.subr.mxu0 0.0
    %v760 = vand.u32 %v121, 4294901760
    %v761 = vsub.f32 %v121, %v760
    %v762 = vand.u32 %v761, 4294901760
    %763 = vmatpush1.msra.mxu0 %v762
    %764 = vmatprep.subr.mxu0 0.0
    %v765 = vand.u32 %v122, 4294901760
    %v766 = vsub.f32 %v122, %v765
    %v767 = vand.u32 %v766, 4294901760
    %768 = vmatpush1.msra.mxu0 %v767
    %769 = vmatprep.subr.mxu0 0.0
    %v770 = vand.u32 %v123, 4294901760
    %v771 = vsub.f32 %v123, %v770
    %v772 = vand.u32 %v771, 4294901760
    %773 = vmatpush1.msra.mxu0 %v772
    %774 = vmatprep.subr.mxu0 0.0
    %v775 = vand.u32 %v124, 4294901760
    %v776 = vsub.f32 %v124, %v775
    %v777 = vand.u32 %v776, 4294901760
    %778 = vmatpush1.msra.mxu0 %v777
    %779 = vmatprep.subr.mxu0 0.0
    %v780 = vand.u32 %v125, 4294901760
    %v781 = vsub.f32 %v125, %v780
    %v782 = vand.u32 %v781, 4294901760
    %783 = vmatpush1.msra.mxu0 %v782
    %784 = vmatprep.subr.mxu0 0.0
    %v785 = vand.u32 %v126, 4294901760
    %v786 = vsub.f32 %v126, %v785
    %v787 = vand.u32 %v786, 4294901760
    %788 = vmatpush1.msra.mxu0 %v787
    %789 = vmatprep.subr.mxu0 0.0
    %v790 = vand.u32 %v127, 4294901760
    %v791 = vsub.f32 %v127, %v790
    %v792 = vand.u32 %v791, 4294901760
    %793 = vmatpush1.msra.mxu0 %v792
    %794 = vmatprep.subr.mxu0 0.0
    %v795 = vand.u32 %v128, 4294901760
    %v796 = vsub.f32 %v128, %v795
    %v797 = vand.u32 %v796, 4294901760
    %798 = vmatpush1.msra.mxu0 %v797
    %799 = vmatprep.subr.mxu0 0.0
    %v800 = vand.u32 %v129, 4294901760
    %v801 = vsub.f32 %v129, %v800
    %v802 = vand.u32 %v801, 4294901760
    %803 = vmatpush1.msra.mxu0 %v802
    %804 = vmatprep.subr.mxu0 0.0
    %v805 = vand.u32 %v130, 4294901760
    %v806 = vsub.f32 %v130, %v805
    %v807 = vand.u32 %v806, 4294901760
    %808 = vmatpush1.msra.mxu0 %v807
    %809 = vmatprep.subr.mxu0 0.0
    %v810 = vand.u32 %v131, 4294901760
    %v811 = vsub.f32 %v131, %v810
    %v812 = vand.u32 %v811, 4294901760
    %813 = vmatpush1.msra.mxu0 %v812
    %814 = vmatprep.subr.mxu0 0.0
    %v815 = vand.u32 %v132, 4294901760
    %v816 = vsub.f32 %v132, %v815
    %v817 = vand.u32 %v816, 4294901760
    %818 = vmatpush1.msra.mxu0 %v817
    %819 = vmatprep.subr.mxu0 0.0
    %v820 = vand.u32 %v133, 4294901760
    %v821 = vsub.f32 %v133, %v820
    %v822 = vand.u32 %v821, 4294901760
    %823 = vmatpush1.msra.mxu0 %v822
    %824 = vmatprep.subr.mxu0 0.0
    %v825 = vand.u32 %v134, 4294901760
    %v826 = vsub.f32 %v134, %v825
    %v827 = vand.u32 %v826, 4294901760
    %828 = vmatpush1.msra.mxu0 %v827
    %829 = vmatprep.subr.mxu0 0.0
    %v830 = vand.u32 %v135, 4294901760
    %v831 = vsub.f32 %v135, %v830
    %v832 = vand.u32 %v831, 4294901760
    %833 = vmatpush1.msra.mxu0 %v832
    %834 = vmatprep.subr.mxu0 0.0
    %v835 = vand.u32 %v136, 4294901760
    %v836 = vsub.f32 %v136, %v835
    %v837 = vand.u32 %v836, 4294901760
    %838 = vmatpush1.msra.mxu0 %v837
    %839 = vmatprep.subr.mxu0 0.0
    %v840 = vand.u32 %v137, 4294901760
    %v841 = vsub.f32 %v137, %v840
    %v842 = vand.u32 %v841, 4294901760
    %843 = vmatpush1.msra.mxu0 %v842
    %844 = vmatprep.subr.mxu0 0.0
    %v845 = vand.u32 %v138, 4294901760
    %v846 = vsub.f32 %v138, %v845
    %v847 = vand.u32 %v846, 4294901760
    %848 = vmatpush1.msra.mxu0 %v847
    %849 = vmatprep.subr.mxu0 0.0
    %v850 = vand.u32 %v139, 4294901760
    %v851 = vsub.f32 %v139, %v850
    %v852 = vand.u32 %v851, 4294901760
    %853 = vmatpush1.msra.mxu0 %v852
    %854 = vmatprep.subr.mxu0 0.0
    %v855 = vand.u32 %v140, 4294901760
    %v856 = vsub.f32 %v140, %v855
    %v857 = vand.u32 %v856, 4294901760
    %858 = vmatpush1.msra.mxu0 %v857
    %859 = vmatprep.subr.mxu0 0.0
    %v860 = vand.u32 %v141, 4294901760
    %v861 = vsub.f32 %v141, %v860
    %v862 = vand.u32 %v861, 4294901760
    %863 = vmatpush1.msra.mxu0 %v862
    %864 = vmatprep.subr.mxu0 0.0
    %v865 = vand.u32 %v142, 4294901760
    %v866 = vsub.f32 %v142, %v865
    %v867 = vand.u32 %v866, 4294901760
    %868 = vmatpush1.msra.mxu0 %v867
    %869 = vmatprep.subr.mxu0 0.0
    %v870 = vand.u32 %v143, 4294901760
    %v871 = vsub.f32 %v143, %v870
    %v872 = vand.u32 %v871, 4294901760
    %873 = vmatpush1.msra.mxu0 %v872
    %874 = vmatprep.subr.mxu0 0.0
    %v875 = vand.u32 %v144, 4294901760
    %v876 = vsub.f32 %v144, %v875
    %v877 = vand.u32 %v876, 4294901760
    %878 = vmatpush1.msra.mxu0 %v877
    %879 = vmatprep.subr.mxu0 0.0
    %v880 = vand.u32 %v145, 4294901760
    %v881 = vsub.f32 %v145, %v880
    %v882 = vand.u32 %v881, 4294901760
    %883 = vmatpush1.msra.mxu0 %v882
    %884 = vmatprep.subr.mxu0 0.0
    %v885 = vand.u32 %v146, 4294901760
    %v886 = vsub.f32 %v146, %v885
    %v887 = vand.u32 %v886, 4294901760
    %888 = vmatpush1.msra.mxu0 %v887
    %889 = vmatprep.subr.mxu0 0.0
    %v890 = vand.u32 %v147, 4294901760
    %v891 = vsub.f32 %v147, %v890
    %v892 = vand.u32 %v891, 4294901760
    %893 = vmatpush1.msra.mxu0 %v892
    %894 = vmatprep.subr.mxu0 0.0
    %v895 = vand.u32 %v148, 4294901760
    %v896 = vsub.f32 %v148, %v895
    %v897 = vand.u32 %v896, 4294901760
    %898 = vmatpush1.msra.mxu0 %v897
    %v899 = vand.u32 %v116, 4294901760
    %900 = vmatprep.mubr.f32.mxu0 %v899
    %v901 = vand.u32 %v115, 4294901760
    %902 = vmatmul.mubr.f32.gmra.mrb[0].mxu0 %v901
    %v903 = vpop.f32.mrb[0].mxu0
    %v904 = vadd.f32 %v736, %v903
    %v905 = vpop.f32.mrb[0].mxu0
    %906 = vdwg.mxu0
    %907 = vmatprep.subr.mxu0 0.0
    %v908 = vand.u32 %v117, 4294901760
    %909 = vmatpush1.msra.mxu0 %v908
    %910 = vmatprep.subr.mxu0 0.0
    %v911 = vand.u32 %v118, 4294901760
    %912 = vmatpush1.msra.mxu0 %v911
    %913 = vmatprep.subr.mxu0 0.0
    %v914 = vand.u32 %v119, 4294901760
    %915 = vmatpush1.msra.mxu0 %v914
    %916 = vmatprep.subr.mxu0 0.0
    %v917 = vand.u32 %v120, 4294901760
    %918 = vmatpush1.msra.mxu0 %v917
    %919 = vmatprep.subr.mxu0 0.0
    %v920 = vand.u32 %v121, 4294901760
    %921 = vmatpush1.msra.mxu0 %v920
    %922 = vmatprep.subr.mxu0 0.0
    %v923 = vand.u32 %v122, 4294901760
    %924 = vmatpush1.msra.mxu0 %v923
    %925 = vmatprep.subr.mxu0 0.0
    %v926 = vand.u32 %v123, 4294901760
    %927 = vmatpush1.msra.mxu0 %v926
    %928 = vmatprep.subr.mxu0 0.0
    %v929 = vand.u32 %v124, 4294901760
    %930 = vmatpush1.msra.mxu0 %v929
    %931 = vmatprep.subr.mxu0 0.0
    %v932 = vand.u32 %v125, 4294901760
    %933 = vmatpush1.msra.mxu0 %v932
    %934 = vmatprep.subr.mxu0 0.0
    %v935 = vand.u32 %v126, 4294901760
    %936 = vmatpush1.msra.mxu0 %v935
    %937 = vmatprep.subr.mxu0 0.0
    %v938 = vand.u32 %v127, 4294901760
    %939 = vmatpush1.msra.mxu0 %v938
    %940 = vmatprep.subr.mxu0 0.0
    %v941 = vand.u32 %v128, 4294901760
    %942 = vmatpush1.msra.mxu0 %v941
    %943 = vmatprep.subr.mxu0 0.0
    %v944 = vand.u32 %v129, 4294901760
    %945 = vmatpush1.msra.mxu0 %v944
    %946 = vmatprep.subr.mxu0 0.0
    %v947 = vand.u32 %v130, 4294901760
    %948 = vmatpush1.msra.mxu0 %v947
    %949 = vmatprep.subr.mxu0 0.0
    %v950 = vand.u32 %v131, 4294901760
    %951 = vmatpush1.msra.mxu0 %v950
    %952 = vmatprep.subr.mxu0 0.0
    %v953 = vand.u32 %v132, 4294901760
    %954 = vmatpush1.msra.mxu0 %v953
    %955 = vmatprep.subr.mxu0 0.0
    %v956 = vand.u32 %v133, 4294901760
    %957 = vmatpush1.msra.mxu0 %v956
    %958 = vmatprep.subr.mxu0 0.0
    %v959 = vand.u32 %v134, 4294901760
    %960 = vmatpush1.msra.mxu0 %v959
    %961 = vmatprep.subr.mxu0 0.0
    %v962 = vand.u32 %v135, 4294901760
    %963 = vmatpush1.msra.mxu0 %v962
    %964 = vmatprep.subr.mxu0 0.0
    %v965 = vand.u32 %v136, 4294901760
    %966 = vmatpush1.msra.mxu0 %v965
    %967 = vmatprep.subr.mxu0 0.0
    %v968 = vand.u32 %v137, 4294901760
    %969 = vmatpush1.msra.mxu0 %v968
    %970 = vmatprep.subr.mxu0 0.0
    %v971 = vand.u32 %v138, 4294901760
    %972 = vmatpush1.msra.mxu0 %v971
    %973 = vmatprep.subr.mxu0 0.0
    %v974 = vand.u32 %v139, 4294901760
    %975 = vmatpush1.msra.mxu0 %v974
    %976 = vmatprep.subr.mxu0 0.0
    %v977 = vand.u32 %v140, 4294901760
    %978 = vmatpush1.msra.mxu0 %v977
    %979 = vmatprep.subr.mxu0 0.0
    %v980 = vand.u32 %v141, 4294901760
    %981 = vmatpush1.msra.mxu0 %v980
    %982 = vmatprep.subr.mxu0 0.0
    %v983 = vand.u32 %v142, 4294901760
    %984 = vmatpush1.msra.mxu0 %v983
    %985 = vmatprep.subr.mxu0 0.0
    %v986 = vand.u32 %v143, 4294901760
    %987 = vmatpush1.msra.mxu0 %v986
    %988 = vmatprep.subr.mxu0 0.0
    %v989 = vand.u32 %v144, 4294901760
    %990 = vmatpush1.msra.mxu0 %v989
    %991 = vmatprep.subr.mxu0 0.0
    %v992 = vand.u32 %v145, 4294901760
    %993 = vmatpush1.msra.mxu0 %v992
    %994 = vmatprep.subr.mxu0 0.0
    %v995 = vand.u32 %v146, 4294901760
    %996 = vmatpush1.msra.mxu0 %v995
    %997 = vmatprep.subr.mxu0 0.0
    %v998 = vand.u32 %v147, 4294901760
    %999 = vmatpush1.msra.mxu0 %v998
    %1000 = vmatprep.subr.mxu0 0.0
    %v1001 = vand.u32 %v148, 4294901760
    %1002 = vmatpush1.msra.mxu0 %v1001
    %v1003 = vand.u32 %v116, 4294901760
    %1004 = vmatprep.mubr.f32.mxu0 %v1003
    %v1005 = vand.u32 %v115, 4294901760
    %1006 = vmatmul.mubr.f32.gmra.mrb[0].mxu0 %v1005
    %v1007 = vpop.f32.mrb[0].mxu0
    %v1008 = vadd.f32 %v904, %v1007
    %v1009 = vpop.f32.mrb[0].mxu0
    %1010 = vdwg.mxu0
    %1011 = vst [vmem:[#allocation7] sm:$0xf] %v1008
    // Predicated region
    $region18: #{tpu_custom_call.1} parent=1 // pred_check
      _
    $region19: #{tpu_custom_call.1} parent=1 // pred_check_branch
      %1013 = sbr.rel (0) target = $region21
    $region20: #{tpu_custom_call.1} parent=1 // pred_region
      %s1015 = ssub.s32 64, 64
      %1016 = vsyncadd [#allocation4], %s1015
      %s1018 = sshll.u32 [#allocation7], 4
      %s1019 = int_to_ptr.vmem [resolvable:$true] %s1018
      %1021 = dma.vmem_to_hbm [thread:$0]  %s1019, 64, %s2, [#allocation4]
    $region21: #{tpu_custom_call.1} parent=1 // pred_fallthru
      _
    // Predicated region
    $region22: #{tpu_custom_call.1} parent=1 // pred_check
      _
    $region23: #{tpu_custom_call.1} parent=1 // pred_check_branch
      %1023 = sbr.rel (0) target = $region25
    $region24: #{tpu_custom_call.1} parent=1 // pred_region
      %1024 = dma.done [#allocation4], 64
    $region25: #{tpu_custom_call.1} parent=1 // pred_fallthru
      _
    %1025 = vsyncpa [#allocation3], 1
    %1026 = vsyncpa [#allocation6], 1
    %1027 = vsyncpa [#allocation4], 1

</llo_original>
